<compile_context>
chip_gen: v7x
topology: tpu7x:2x2x1
jax: 0.10.0
libtpu: 0.0.40
codegen_flags: <defaults>
</compile_context>

<pallas_src>
import functools

import jax
import jax.numpy as jnp
from jax import lax
from jax.experimental import pallas as pl
from jax.experimental.pallas import tpu as pltpu

LAMBDA_BOX = 7.5
LAMBDA_CONF = 3.0
IOU_THRESH = 0.3
FOCAL_ALPHA = 0.25
FOCAL_GAMMA = 2.0            # == 2 -> explicit square in-kernel (no pow lowering)
EPS = 1e-7                   # torchvision complete_box_iou_loss eps


def _detection_loss_kernel(nt_ref, pred_ref, tcols_ref, tfm_ref, out_ref,
                           *, use_mxu_gather):
    B, _, N = pred_ref.shape
    Mp = tcols_ref.shape[1]

    conf_sum = jnp.zeros((1, 1), jnp.float32)
    box_sum = jnp.zeros((1, 1), jnp.float32)
    n_img = jnp.zeros((1, 1), jnp.float32)

    # B is small: unroll the per-image matching at trace time.
    # TODO(synk): for large B, chunk the batch over a grid axis instead.
    for b in range(B):
        pred = pred_ref[b]                      # (6, N): cx cy w h logit atan
        tcols = tcols_ref[b]                    # (Mp, 5): x1 y1 x2 y2 atan
        n_t = nt_ref[b]                         # scalar int32 (SMEM)

        pcx = pred[0:1, :]
        pcy = pred[1:2, :]
        pw = pred[2:3, :]
        ph = pred[3:4, :]
        logits = pred[4:5, :]
        atan_p = pred[5:6, :]
        px1 = pcx - 0.5 * pw
        py1 = pcy - 0.5 * ph
        px2 = pcx + 0.5 * pw
        py2 = pcy + 0.5 * ph
        area_p = pw * ph                        # (1, N), reused in IoU + CIoU

        tx1 = tcols[:, 0:1]
        ty1 = tcols[:, 1:2]
        tx2 = tcols[:, 2:3]
        ty2 = tcols[:, 3:4]
        atan_t = tcols[:, 4:5]                  # (Mp, 1)
        area_t = (tx2 - tx1) * (ty2 - ty1)      # (Mp, 1)

        # ---- pairwise IoU: targets on sublanes, preds on lanes -> (Mp, N) ----
        iw = jnp.maximum(jnp.minimum(px2, tx2) - jnp.maximum(px1, tx1), 0.0)
        ih = jnp.maximum(jnp.minimum(py2, ty2) - jnp.maximum(py1, ty1), 0.0)
        inter = iw * ih
        denom = area_p + area_t - inter
        iou = jnp.where(denom > 0.0, inter / denom, 0.0)   # NaN-safe, else exact

        tid = lax.broadcasted_iota(jnp.int32, (Mp, N), 0)
        iou_m = jnp.where(tid < n_t, iou, -1.0)
        best_iou = jnp.max(iou_m, axis=0, keepdims=True)   # (1, N)
        matched = best_iou > IOU_THRESH                    # (1, N) bool
        conf_target = matched.astype(jnp.float32)

        # best_gt = first target attaining the max (one-hot, no gather)
        best_gt = jnp.min(jnp.where(iou_m == best_iou, tid, Mp),
                          axis=0, keepdims=True)           # (1, N)
        onehot = tid == best_gt                            # (Mp, N) bool

        if use_mxu_gather:
            # gather all matched-target features with one MXU matmul
            sel = jnp.dot(tfm_ref[b], onehot.astype(jnp.float32),
                          preferred_element_type=jnp.float32)   # (8, N)
            gx1 = sel[0:1, :]
            gy1 = sel[1:2, :]
            gx2 = sel[2:3, :]
            gy2 = sel[3:4, :]
            g_atan = sel[4:5, :]
        else:
            def sel_col(col):                    # (Mp, 1) -> (1, N)
                return jnp.sum(jnp.where(onehot, col, 0.0),
                               axis=0, keepdims=True)
            gx1, gy1, gx2, gy2, g_atan = [sel_col(c) for c in
                                          (tx1, ty1, tx2, ty2, atan_t)]

        # ---- focal conf loss (BCE-with-logits core), 2 EUP ops per element ----
        s = 0.5 * (jnp.tanh(0.5 * logits) + 1.0)            # sigmoid(x)
        p_t = conf_target * s + (1.0 - conf_target) * (1.0 - s)
        bce = -jnp.log(jnp.maximum(p_t, 1e-12))
        one_m = 1.0 - p_t
        focal = FOCAL_ALPHA * one_m * one_m * bce           # gamma == 2
        conf_sum = conf_sum + jnp.sum(focal, axis=(0, 1), keepdims=True)

        # ---- torchvision complete_box_iou_loss (CIoU), per pred (1, N) ----
        xk1 = jnp.maximum(px1, gx1)
        yk1 = jnp.maximum(py1, gy1)
        xk2 = jnp.minimum(px2, gx2)
        yk2 = jnp.minimum(py2, gy2)
        has_int = (xk2 > xk1) & (yk2 > yk1)
        intsct = jnp.where(has_int, (xk2 - xk1) * (yk2 - yk1), 0.0)
        area_g = (gx2 - gx1) * (gy2 - gy1)
        union = area_p + area_g - intsct
        iou2 = intsct / (union + EPS)
        xc1 = jnp.minimum(px1, gx1)
        yc1 = jnp.minimum(py1, gy1)
        xc2 = jnp.maximum(px2, gx2)
        yc2 = jnp.maximum(py2, gy2)
        diag = (xc2 - xc1) ** 2 + (yc2 - yc1) ** 2 + EPS
        cdist = ((px1 + px2 - gx1 - gx2) ** 2 +
                 (py1 + py2 - gy1 - gy2) ** 2) * 0.25
        diou = 1.0 - iou2 + cdist / diag
        v = (4.0 / (jnp.pi ** 2)) * (g_atan - atan_p) ** 2
        alpha_c = v / (1.0 - iou2 + v + EPS)
        ciou = diou + alpha_c * v                            # (1, N)

        num_pos = jnp.sum(conf_target, axis=(0, 1), keepdims=True)       # (1, 1)
        box_masked = jnp.sum(jnp.where(matched, ciou, 0.0),
                             axis=(0, 1), keepdims=True)                 # (1, 1)
        has_pos = num_pos > 0.0
        box_sum = box_sum + jnp.where(
            has_pos, box_masked / jnp.maximum(num_pos, 1.0), 0.0)
        n_img = n_img + jnp.where(has_pos, 1.0, 0.0)

    final_conf = conf_sum / float(B * N)
    final_box = jnp.where(n_img > 0.0, box_sum / jnp.maximum(n_img, 1.0), 0.0)
    out_ref[...] = LAMBDA_CONF * final_conf + LAMBDA_BOX * final_box


def _prepare_inputs(preds, targets):
    preds = preds.astype(jnp.float32)
    targets = targets.astype(jnp.float32)
    B, N, _ = preds.shape
    M = targets.shape[1]
    Mp = max(8, ((M + 7) // 8) * 8)     # pad targets up to a multiple of 8 sublanes

    # preds -> feature-major [B, 6, N] so the big prediction dim sits on lanes.
    # TODO(synk): jnp.arctan has no reliable Mosaic lowering; the CIoU aspect
    # terms arctan(w/h) are precomputed here (cxcywh->xyxy preserves w and h).
    atan_p = jnp.arctan(preds[..., 2] / preds[..., 3])                    # [B, N]
    pred_fm = jnp.concatenate(
        [jnp.transpose(preds, (0, 2, 1)), atan_p[:, None, :]], axis=1)    # [B, 6, N]

    tcx, tcy, tw, th = (targets[..., i] for i in range(4))                # [B, M]
    tx1, ty1 = tcx - 0.5 * tw, tcy - 0.5 * th
    tx2, ty2 = tcx + 0.5 * tw, tcy + 0.5 * th
    atan_t = jnp.arctan(tw / th)
    tfeat = jnp.stack([tx1, ty1, tx2, ty2, atan_t], axis=1)               # [B, 5, M]
    tfeat = jnp.pad(tfeat, ((0, 0), (0, 0), (0, Mp - M)))                 # [B, 5, Mp]
    tfm = jnp.pad(tfeat, ((0, 0), (0, 3), (0, 0)))                        # [B, 8, Mp]
    tcols = jnp.transpose(tfeat, (0, 2, 1))                               # [B, Mp, 5]
    return pred_fm, tcols, tfm


def _build_call(B, N, Mp, use_mxu_gather):
    grid_spec = pltpu.PrefetchScalarGridSpec(
        num_scalar_prefetch=1,
        grid=(1,),                                   # whole batch in one grid step
        in_specs=[
            pl.BlockSpec((B, 6, N), lambda i, nt: (0, 0, 0)),
            pl.BlockSpec((B, Mp, 5), lambda i, nt: (0, 0, 0)),
            pl.BlockSpec((B, 8, Mp), lambda i, nt: (0, 0, 0)),
        ],
        out_specs=pl.BlockSpec((1, 1), lambda i, nt: (0, 0)),
    )
    return pl.pallas_call(
        functools.partial(_detection_loss_kernel, use_mxu_gather=use_mxu_gather),
        out_shape=jax.ShapeDtypeStruct((1, 1), jnp.float32),
        grid_spec=grid_spec,
        compiler_params=pltpu.CompilerParams(
            dimension_semantics=("arbitrary",),
            vmem_limit_bytes=32 * 1024 * 1024,       # safe on v5e/v6e/v7x
        ),
    )


def detection_loss(preds, targets, num_targets):
    """preds: [B, N, 5] (cx, cy, w, h, conf_logit); targets: [B, M, 4] (cxcywh);
    num_targets: [B] int32 valid-target counts. Returns scalar f32 loss."""
    B, N, _ = preds.shape
    pred_fm, tcols, tfm = _prepare_inputs(preds, targets)
    Mp = tcols.shape[1]
    nt = num_targets.astype(jnp.int32)
    try:
        out = _build_call(B, N, Mp, True)(nt, pred_fm, tcols, tfm)
        out = jax.block_until_ready(out)
    except Exception:
        # Fallback: masked sublane-sum gather instead of the small MXU matmul.
        out = _build_call(B, N, Mp, False)(nt, pred_fm, tcols, tfm)
    return out[0, 0]


# ---------------- pure-JAX reference (mirrors the PyTorch module) -------------
def detection_loss_ref(preds, targets, num_targets):
    B, N, _ = preds.shape
    conf_sum = 0.0
    box_sum = 0.0
    n_img = 0
    for b in range(B):
        p = preds[b]
        t = targets[b][: int(num_targets[b])]
        cx, cy, w, h, logit = (p[:, i] for i in range(5))
        px1, py1, px2, py2 = cx - w / 2, cy - h / 2, cx + w / 2, cy + h / 2
        if t.shape[0] > 0:
            tcx, tcy, tw, th = (t[:, i] for i in range(4))
            tx1, ty1, tx2, ty2 = tcx - tw / 2, tcy - th / 2, tcx + tw / 2, tcy + th / 2
            area_p = (px2 - px1) * (py2 - py1)
            area_t = (tx2 - tx1) * (ty2 - ty1)
            iw = jnp.clip(jnp.minimum(px2[:, None], tx2[None, :]) -
                          jnp.maximum(px1[:, None], tx1[None, :]), 0)
            ih = jnp.clip(jnp.minimum(py2[:, None], ty2[None, :]) -
                          jnp.maximum(py1[:, None], ty1[None, :]), 0)
            inter = iw * ih
            iou = inter / (area_p[:, None] + area_t[None, :] - inter)
            best_iou = iou.max(axis=1)
            best_gt = iou.argmax(axis=1)
            matched = best_iou > IOU_THRESH
        else:
            matched = jnp.zeros((N,), bool)
        conf_t = matched.astype(jnp.float32)
        x = logit
        bce = jnp.maximum(x, 0.0) - x * conf_t + jnp.log(1.0 + jnp.exp(-jnp.abs(x)))
        p_t = jnp.exp(-bce)
        conf_sum += (FOCAL_ALPHA * (1.0 - p_t) ** FOCAL_GAMMA * bce).mean()
        if bool(matched.any()):
            gi = best_gt[matched]
            bx1, by1, bx2, by2 = px1[matched], py1[matched], px2[matched], py2[matched]
            gx1, gy1, gx2, gy2 = tx1[gi], ty1[gi], tx2[gi], ty2[gi]
            xk1, yk1 = jnp.maximum(bx1, gx1), jnp.maximum(by1, gy1)
            xk2, yk2 = jnp.minimum(bx2, gx2), jnp.minimum(by2, gy2)
            intsct = jnp.where((yk2 > yk1) & (xk2 > xk1), (xk2 - xk1) * (yk2 - yk1), 0.0)
            union = (bx2 - bx1) * (by2 - by1) + (gx2 - gx1) * (gy2 - gy1) - intsct
            iou2 = intsct / (union + EPS)
            diag = (jnp.maximum(bx2, gx2) - jnp.minimum(bx1, gx1)) ** 2 + \
                   (jnp.maximum(by2, gy2) - jnp.minimum(by1, gy1)) ** 2 + EPS
            cdist = ((bx1 + bx2 - gx1 - gx2) ** 2 + (by1 + by2 - gy1 - gy2) ** 2) / 4.0
            diou = 1.0 - iou2 + cdist / diag
            v = (4.0 / jnp.pi ** 2) * (jnp.arctan((gx2 - gx1) / (gy2 - gy1)) -
                                       jnp.arctan((bx2 - bx1) / (by2 - by1))) ** 2
            alpha_c = v / (1.0 - iou2 + v + EPS)
            box_sum += (diou + alpha_c * v).mean()
            n_img += 1
    final_conf = conf_sum / B
    final_box = box_sum / n_img if n_img > 0 else 0.0
    return LAMBDA_CONF * final_conf + LAMBDA_BOX * final_box


if __name__ == "__main__":
    B, N, M = 2, 64, 8
    key = jax.random.PRNGKey(0)
    k1, k2, k3, k4, k5 = jax.random.split(key, 5)

    pred_xy = jax.random.uniform(k1, (B, N, 2), minval=0.1, maxval=0.9)
    pred_wh = jax.random.uniform(k2, (B, N, 2), minval=0.05, maxval=0.4)
    pred_logit = jax.random.normal(k3, (B, N, 1))
    preds = jnp.concatenate([pred_xy, pred_wh, pred_logit], axis=-1).astype(jnp.float32)

    targ_xy = jax.random.uniform(k4, (B, M, 2), minval=0.1, maxval=0.9)
    targ_wh = jax.random.uniform(k5, (B, M, 2), minval=0.1, maxval=0.5)
    targets = jnp.concatenate([targ_xy, targ_wh], axis=-1).astype(jnp.float32)

    # second image has only 5 valid targets (padding rows are masked in-kernel)
    num_targets = jnp.array([M, 5], dtype=jnp.int32)

    loss = jax.block_until_ready(detection_loss(preds, targets, num_targets))
    ref = detection_loss_ref(preds, targets, num_targets)
    assert jnp.isfinite(loss)
    assert abs(float(loss) - float(ref)) <= 1e-3 * abs(float(ref)) + 1e-5, (loss, ref)
    print("KERNEL_OK")
</pallas_src>

<mosaic_0001>
module attributes {stable_mosaic.version = 11 : i64} {
  func.func @_detection_loss_kernel(%arg0: i32, %arg1: memref<2xi32, #tpu.memory_space<smem>>, %arg2: memref<2x6x64xf32, #tpu.memory_space<vmem>>, %arg3: memref<2x8x5xf32, #tpu.memory_space<vmem>>, %arg4: memref<2x8x8xf32, #tpu.memory_space<vmem>>, %arg5: memref<1x1xf32, #tpu.memory_space<vmem>>) attributes {dimension_semantics = [#tpu.dimension_semantics<arbitrary>], iteration_bounds = array<i64: 1>, scalar_prefetch = 1 : i64, scratch_operands = 0 : i64, tpu.core_type = #tpu.core_type<tc>, window_params = [{pipeline_mode = #tpu.pipeline_mode<synchronous>, transform_indices = @transform_0, window_bounds = array<i64: 2, 6, 64>}, {pipeline_mode = #tpu.pipeline_mode<synchronous>, transform_indices = @transform_1, window_bounds = array<i64: 2, 8, 5>}, {pipeline_mode = #tpu.pipeline_mode<synchronous>, transform_indices = @transform_2, window_bounds = array<i64: 2, 8, 8>}, {pipeline_mode = #tpu.pipeline_mode<synchronous>, transform_indices = @transform_3, window_bounds = array<i64: 1, 1>}]} {
    %cst = arith.constant 0.000000e+00 : f32
    %0 = vector.broadcast %cst : f32 to vector<1x1xf32>
    %cst_0 = arith.constant 0.000000e+00 : f32
    %1 = vector.broadcast %cst_0 : f32 to vector<1x1xf32>
    %cst_1 = arith.constant 0.000000e+00 : f32
    %2 = vector.broadcast %cst_1 : f32 to vector<1x1xf32>
    %c0 = arith.constant 0 : index
    %c0_2 = arith.constant 0 : index
    %c0_3 = arith.constant 0 : index
    %3 = vector.load %arg2[%c0, %c0_2, %c0_3] : memref<2x6x64xf32, #tpu.memory_space<vmem>>, vector<1x6x64xf32>
    %4 = vector.shape_cast %3 : vector<1x6x64xf32> to vector<6x64xf32>
    %c0_4 = arith.constant 0 : index
    %c0_5 = arith.constant 0 : index
    %c0_6 = arith.constant 0 : index
    %5 = vector.load %arg3[%c0_4, %c0_5, %c0_6] : memref<2x8x5xf32, #tpu.memory_space<vmem>>, vector<1x8x5xf32>
    %6 = vector.shape_cast %5 : vector<1x8x5xf32> to vector<8x5xf32>
    %c0_7 = arith.constant 0 : index
    %7 = memref.load %arg1[%c0_7] : memref<2xi32, #tpu.memory_space<smem>>
    %8 = vector.extract_strided_slice %4 {offsets = [0, 0], sizes = [1, 64], strides = [1, 1]} : vector<6x64xf32> to vector<1x64xf32>
    %9 = vector.extract_strided_slice %4 {offsets = [1, 0], sizes = [1, 64], strides = [1, 1]} : vector<6x64xf32> to vector<1x64xf32>
    %10 = vector.extract_strided_slice %4 {offsets = [2, 0], sizes = [1, 64], strides = [1, 1]} : vector<6x64xf32> to vector<1x64xf32>
    %11 = vector.extract_strided_slice %4 {offsets = [3, 0], sizes = [1, 64], strides = [1, 1]} : vector<6x64xf32> to vector<1x64xf32>
    %12 = vector.extract_strided_slice %4 {offsets = [4, 0], sizes = [1, 64], strides = [1, 1]} : vector<6x64xf32> to vector<1x64xf32>
    %13 = vector.extract_strided_slice %4 {offsets = [5, 0], sizes = [1, 64], strides = [1, 1]} : vector<6x64xf32> to vector<1x64xf32>
    %cst_8 = arith.constant 5.000000e-01 : f32
    %14 = vector.broadcast %cst_8 : f32 to vector<1x64xf32>
    %15 = arith.mulf %14, %10 : vector<1x64xf32>
    %16 = arith.subf %8, %15 : vector<1x64xf32>
    %cst_9 = arith.constant 5.000000e-01 : f32
    %17 = vector.broadcast %cst_9 : f32 to vector<1x64xf32>
    %18 = arith.mulf %17, %11 : vector<1x64xf32>
    %19 = arith.subf %9, %18 : vector<1x64xf32>
    %cst_10 = arith.constant 5.000000e-01 : f32
    %20 = vector.broadcast %cst_10 : f32 to vector<1x64xf32>
    %21 = arith.mulf %20, %10 : vector<1x64xf32>
    %22 = arith.addf %8, %21 : vector<1x64xf32>
    %cst_11 = arith.constant 5.000000e-01 : f32
    %23 = vector.broadcast %cst_11 : f32 to vector<1x64xf32>
    %24 = arith.mulf %23, %11 : vector<1x64xf32>
    %25 = arith.addf %9, %24 : vector<1x64xf32>
    %26 = arith.mulf %10, %11 : vector<1x64xf32>
    %27 = vector.extract_strided_slice %6 {offsets = [0, 0], sizes = [8, 1], strides = [1, 1]} : vector<8x5xf32> to vector<8x1xf32>
    %28 = vector.extract_strided_slice %6 {offsets = [0, 1], sizes = [8, 1], strides = [1, 1]} : vector<8x5xf32> to vector<8x1xf32>
    %29 = vector.extract_strided_slice %6 {offsets = [0, 2], sizes = [8, 1], strides = [1, 1]} : vector<8x5xf32> to vector<8x1xf32>
    %30 = vector.extract_strided_slice %6 {offsets = [0, 3], sizes = [8, 1], strides = [1, 1]} : vector<8x5xf32> to vector<8x1xf32>
    %31 = arith.subf %29, %27 : vector<8x1xf32>
    %32 = arith.subf %30, %28 : vector<8x1xf32>
    %33 = arith.mulf %31, %32 : vector<8x1xf32>
    %34 = vector.broadcast %22 : vector<1x64xf32> to vector<8x64xf32>
    %35 = vector.broadcast %29 : vector<8x1xf32> to vector<8x64xf32>
    %36 = arith.minimumf %34, %35 : vector<8x64xf32>
    %37 = vector.broadcast %16 : vector<1x64xf32> to vector<8x64xf32>
    %38 = vector.broadcast %27 : vector<8x1xf32> to vector<8x64xf32>
    %39 = arith.maximumf %37, %38 : vector<8x64xf32>
    %40 = arith.subf %36, %39 : vector<8x64xf32>
    %cst_12 = arith.constant 0.000000e+00 : f32
    %41 = vector.broadcast %cst_12 : f32 to vector<8x64xf32>
    %42 = arith.maximumf %40, %41 : vector<8x64xf32>
    %43 = vector.broadcast %25 : vector<1x64xf32> to vector<8x64xf32>
    %44 = vector.broadcast %30 : vector<8x1xf32> to vector<8x64xf32>
    %45 = arith.minimumf %43, %44 : vector<8x64xf32>
    %46 = vector.broadcast %19 : vector<1x64xf32> to vector<8x64xf32>
    %47 = vector.broadcast %28 : vector<8x1xf32> to vector<8x64xf32>
    %48 = arith.maximumf %46, %47 : vector<8x64xf32>
    %49 = arith.subf %45, %48 : vector<8x64xf32>
    %cst_13 = arith.constant 0.000000e+00 : f32
    %50 = vector.broadcast %cst_13 : f32 to vector<8x64xf32>
    %51 = arith.maximumf %49, %50 : vector<8x64xf32>
    %52 = arith.mulf %42, %51 : vector<8x64xf32>
    %53 = vector.broadcast %26 : vector<1x64xf32> to vector<8x64xf32>
    %54 = vector.broadcast %33 : vector<8x1xf32> to vector<8x64xf32>
    %55 = arith.addf %53, %54 : vector<8x64xf32>
    %56 = arith.subf %55, %52 : vector<8x64xf32>
    %cst_14 = arith.constant 0.000000e+00 : f32
    %57 = vector.broadcast %cst_14 : f32 to vector<8x64xf32>
    %58 = arith.cmpf ogt, %56, %57 : vector<8x64xf32>
    %59 = arith.divf %52, %56 : vector<8x64xf32>
    %cst_15 = arith.constant 0.000000e+00 : f32
    %60 = vector.broadcast %cst_15 : f32 to vector<8x64xf32>
    %61 = arith.select %58, %59, %60 : vector<8x64xi1>, vector<8x64xf32>
    %62 = tpu.iota {dimensions = array<i32: 0>} : vector<8x64xi32>
    %63 = vector.broadcast %7 : i32 to vector<8x64xi32>
    %64 = arith.cmpi slt, %62, %63 : vector<8x64xi32>
    %cst_16 = arith.constant -1.000000e+00 : f32
    %65 = vector.broadcast %cst_16 : f32 to vector<8x64xf32>
    %66 = arith.select %64, %61, %65 : vector<8x64xi1>, vector<8x64xf32>
    %cst_17 = arith.constant dense<0xFF800000> : vector<64xf32>
    %67 = vector.multi_reduction <maximumf>, %66, %cst_17 [0] : vector<8x64xf32> to vector<64xf32>
    %68 = vector.shape_cast %67 : vector<64xf32> to vector<1x64xf32>
    %cst_18 = arith.constant 3.000000e-01 : f32
    %69 = vector.broadcast %cst_18 : f32 to vector<1x64xf32>
    %70 = arith.cmpf ogt, %68, %69 : vector<1x64xf32>
    %71 = arith.extui %70 : vector<1x64xi1> to vector<1x64xi32>
    %72 = arith.sitofp %71 : vector<1x64xi32> to vector<1x64xf32>
    %73 = vector.broadcast %68 : vector<1x64xf32> to vector<8x64xf32>
    %74 = arith.cmpf oeq, %66, %73 : vector<8x64xf32>
    %c8_i32 = arith.constant 8 : i32
    %75 = vector.broadcast %c8_i32 : i32 to vector<8x64xi32>
    %76 = arith.select %74, %62, %75 : vector<8x64xi1>, vector<8x64xi32>
    %cst_19 = arith.constant dense<2147483647> : vector<64xi32>
    %77 = vector.multi_reduction <minsi>, %76, %cst_19 [0] : vector<8x64xi32> to vector<64xi32>
    %78 = vector.shape_cast %77 : vector<64xi32> to vector<1x64xi32>
    %79 = vector.broadcast %78 : vector<1x64xi32> to vector<8x64xi32>
    %80 = arith.cmpi eq, %62, %79 : vector<8x64xi32>
    %c0_20 = arith.constant 0 : index
    %c0_21 = arith.constant 0 : index
    %c0_22 = arith.constant 0 : index
    %81 = vector.load %arg4[%c0_20, %c0_21, %c0_22] : memref<2x8x8xf32, #tpu.memory_space<vmem>>, vector<1x8x8xf32>
    %82 = vector.shape_cast %81 : vector<1x8x8xf32> to vector<8x8xf32>
    %83 = arith.extui %80 : vector<8x64xi1> to vector<8x64xi32>
    %84 = arith.sitofp %83 : vector<8x64xi32> to vector<8x64xf32>
    %cst_23 = arith.constant dense<0.000000e+00> : vector<8x64xf32>
    %85 = tpu.matmul %82, %84, %cst_23 {dimension_numbers = #tpu.dot_dimension_numbers<[1], [0], [0], [1], [0, 0, 1, 1], [], []>} : vector<8x8xf32>, vector<8x64xf32>, vector<8x64xf32> -> vector<8x64xf32>
    %86 = vector.extract_strided_slice %85 {offsets = [0, 0], sizes = [1, 64], strides = [1, 1]} : vector<8x64xf32> to vector<1x64xf32>
    %87 = vector.extract_strided_slice %85 {offsets = [1, 0], sizes = [1, 64], strides = [1, 1]} : vector<8x64xf32> to vector<1x64xf32>
    %88 = vector.extract_strided_slice %85 {offsets = [2, 0], sizes = [1, 64], strides = [1, 1]} : vector<8x64xf32> to vector<1x64xf32>
    %89 = vector.extract_strided_slice %85 {offsets = [3, 0], sizes = [1, 64], strides = [1, 1]} : vector<8x64xf32> to vector<1x64xf32>
    %90 = vector.extract_strided_slice %85 {offsets = [4, 0], sizes = [1, 64], strides = [1, 1]} : vector<8x64xf32> to vector<1x64xf32>
    %cst_24 = arith.constant 5.000000e-01 : f32
    %91 = vector.broadcast %cst_24 : f32 to vector<1x64xf32>
    %92 = arith.mulf %91, %12 : vector<1x64xf32>
    %93 = math.tanh %92 : vector<1x64xf32>
    %cst_25 = arith.constant 1.000000e+00 : f32
    %94 = vector.broadcast %cst_25 : f32 to vector<1x64xf32>
    %95 = arith.addf %93, %94 : vector<1x64xf32>
    %cst_26 = arith.constant 5.000000e-01 : f32
    %96 = vector.broadcast %cst_26 : f32 to vector<1x64xf32>
    %97 = arith.mulf %96, %95 : vector<1x64xf32>
    %98 = arith.mulf %72, %97 : vector<1x64xf32>
    %cst_27 = arith.constant 1.000000e+00 : f32
    %99 = vector.broadcast %cst_27 : f32 to vector<1x64xf32>
    %100 = arith.subf %99, %72 : vector<1x64xf32>
    %cst_28 = arith.constant 1.000000e+00 : f32
    %101 = vector.broadcast %cst_28 : f32 to vector<1x64xf32>
    %102 = arith.subf %101, %97 : vector<1x64xf32>
    %103 = arith.mulf %100, %102 : vector<1x64xf32>
    %104 = arith.addf %98, %103 : vector<1x64xf32>
    %cst_29 = arith.constant 9.99999996E-13 : f32
    %105 = vector.broadcast %cst_29 : f32 to vector<1x64xf32>
    %106 = arith.maximumf %104, %105 : vector<1x64xf32>
    %107 = math.log %106 : vector<1x64xf32>
    %cst_30 = arith.constant 0.000000e+00 : f32
    %108 = vector.broadcast %cst_30 : f32 to vector<1x64xf32>
    %109 = arith.subf %108, %107 : vector<1x64xf32>
    %cst_31 = arith.constant 1.000000e+00 : f32
    %110 = vector.broadcast %cst_31 : f32 to vector<1x64xf32>
    %111 = arith.subf %110, %104 : vector<1x64xf32>
    %cst_32 = arith.constant 2.500000e-01 : f32
    %112 = vector.broadcast %cst_32 : f32 to vector<1x64xf32>
    %113 = arith.mulf %112, %111 : vector<1x64xf32>
    %114 = arith.mulf %113, %111 : vector<1x64xf32>
    %115 = arith.mulf %114, %109 : vector<1x64xf32>
    %116 = vector.shape_cast %115 : vector<1x64xf32> to vector<1x1x64xf32>
    %cst_33 = arith.constant dense<0.000000e+00> : vector<1xf32>
    %117 = vector.multi_reduction <add>, %116, %cst_33 [1, 2] : vector<1x1x64xf32> to vector<1xf32>
    %118 = vector.shape_cast %117 : vector<1xf32> to vector<1x1x1xf32>
    %119 = vector.extract %118[0, 0, 0] : f32 from vector<1x1x1xf32>
    %120 = vector.broadcast %119 : f32 to vector<1x1xf32>
    %121 = arith.addf %0, %120 : vector<1x1xf32>
    %122 = arith.maximumf %16, %86 : vector<1x64xf32>
    %123 = arith.maximumf %19, %87 : vector<1x64xf32>
    %124 = arith.minimumf %22, %88 : vector<1x64xf32>
    %125 = arith.minimumf %25, %89 : vector<1x64xf32>
    %126 = arith.cmpf ogt, %124, %122 : vector<1x64xf32>
    %127 = arith.cmpf ogt, %125, %123 : vector<1x64xf32>
    %128 = arith.andi %126, %127 : vector<1x64xi1>
    %129 = arith.subf %124, %122 : vector<1x64xf32>
    %130 = arith.subf %125, %123 : vector<1x64xf32>
    %131 = arith.mulf %129, %130 : vector<1x64xf32>
    %cst_34 = arith.constant 0.000000e+00 : f32
    %132 = vector.broadcast %cst_34 : f32 to vector<1x64xf32>
    %133 = arith.select %128, %131, %132 : vector<1x64xi1>, vector<1x64xf32>
    %134 = arith.subf %88, %86 : vector<1x64xf32>
    %135 = arith.subf %89, %87 : vector<1x64xf32>
    %136 = arith.mulf %134, %135 : vector<1x64xf32>
    %137 = arith.addf %26, %136 : vector<1x64xf32>
    %138 = arith.subf %137, %133 : vector<1x64xf32>
    %cst_35 = arith.constant 1.000000e-07 : f32
    %139 = vector.broadcast %cst_35 : f32 to vector<1x64xf32>
    %140 = arith.addf %138, %139 : vector<1x64xf32>
    %141 = arith.divf %133, %140 : vector<1x64xf32>
    %142 = arith.minimumf %16, %86 : vector<1x64xf32>
    %143 = arith.minimumf %19, %87 : vector<1x64xf32>
    %144 = arith.maximumf %22, %88 : vector<1x64xf32>
    %145 = arith.maximumf %25, %89 : vector<1x64xf32>
    %146 = arith.subf %144, %142 : vector<1x64xf32>
    %147 = arith.mulf %146, %146 : vector<1x64xf32>
    %148 = arith.subf %145, %143 : vector<1x64xf32>
    %149 = arith.mulf %148, %148 : vector<1x64xf32>
    %150 = arith.addf %147, %149 : vector<1x64xf32>
    %cst_36 = arith.constant 1.000000e-07 : f32
    %151 = vector.broadcast %cst_36 : f32 to vector<1x64xf32>
    %152 = arith.addf %150, %151 : vector<1x64xf32>
    %153 = arith.addf %16, %22 : vector<1x64xf32>
    %154 = arith.subf %153, %86 : vector<1x64xf32>
    %155 = arith.subf %154, %88 : vector<1x64xf32>
    %156 = arith.mulf %155, %155 : vector<1x64xf32>
    %157 = arith.addf %19, %25 : vector<1x64xf32>
    %158 = arith.subf %157, %87 : vector<1x64xf32>
    %159 = arith.subf %158, %89 : vector<1x64xf32>
    %160 = arith.mulf %159, %159 : vector<1x64xf32>
    %161 = arith.addf %156, %160 : vector<1x64xf32>
    %cst_37 = arith.constant 2.500000e-01 : f32
    %162 = vector.broadcast %cst_37 : f32 to vector<1x64xf32>
    %163 = arith.mulf %161, %162 : vector<1x64xf32>
    %cst_38 = arith.constant 1.000000e+00 : f32
    %164 = vector.broadcast %cst_38 : f32 to vector<1x64xf32>
    %165 = arith.subf %164, %141 : vector<1x64xf32>
    %166 = arith.divf %163, %152 : vector<1x64xf32>
    %167 = arith.addf %165, %166 : vector<1x64xf32>
    %168 = arith.subf %90, %13 : vector<1x64xf32>
    %169 = arith.mulf %168, %168 : vector<1x64xf32>
    %cst_39 = arith.constant 0.405284733 : f32
    %170 = vector.broadcast %cst_39 : f32 to vector<1x64xf32>
    %171 = arith.mulf %170, %169 : vector<1x64xf32>
    %cst_40 = arith.constant 1.000000e+00 : f32
    %172 = vector.broadcast %cst_40 : f32 to vector<1x64xf32>
    %173 = arith.subf %172, %141 : vector<1x64xf32>
    %174 = arith.addf %173, %171 : vector<1x64xf32>
    %cst_41 = arith.constant 1.000000e-07 : f32
    %175 = vector.broadcast %cst_41 : f32 to vector<1x64xf32>
    %176 = arith.addf %174, %175 : vector<1x64xf32>
    %177 = arith.divf %171, %176 : vector<1x64xf32>
    %178 = arith.mulf %177, %171 : vector<1x64xf32>
    %179 = arith.addf %167, %178 : vector<1x64xf32>
    %180 = vector.shape_cast %72 : vector<1x64xf32> to vector<1x1x64xf32>
    %cst_42 = arith.constant dense<0.000000e+00> : vector<1xf32>
    %181 = vector.multi_reduction <add>, %180, %cst_42 [1, 2] : vector<1x1x64xf32> to vector<1xf32>
    %182 = vector.shape_cast %181 : vector<1xf32> to vector<1x1x1xf32>
    %183 = vector.extract %182[0, 0, 0] : f32 from vector<1x1x1xf32>
    %184 = vector.broadcast %183 : f32 to vector<1x1xf32>
    %cst_43 = arith.constant 0.000000e+00 : f32
    %185 = vector.broadcast %cst_43 : f32 to vector<1x64xf32>
    %186 = arith.select %70, %179, %185 : vector<1x64xi1>, vector<1x64xf32>
    %187 = vector.shape_cast %186 : vector<1x64xf32> to vector<1x1x64xf32>
    %cst_44 = arith.constant dense<0.000000e+00> : vector<1xf32>
    %188 = vector.multi_reduction <add>, %187, %cst_44 [1, 2] : vector<1x1x64xf32> to vector<1xf32>
    %189 = vector.shape_cast %188 : vector<1xf32> to vector<1x1x1xf32>
    %190 = vector.extract %189[0, 0, 0] : f32 from vector<1x1x1xf32>
    %191 = vector.broadcast %190 : f32 to vector<1x1xf32>
    %cst_45 = arith.constant 0.000000e+00 : f32
    %192 = vector.broadcast %cst_45 : f32 to vector<1x1xf32>
    %193 = arith.cmpf ogt, %184, %192 : vector<1x1xf32>
    %cst_46 = arith.constant 1.000000e+00 : f32
    %194 = vector.broadcast %cst_46 : f32 to vector<1x1xf32>
    %195 = arith.maximumf %184, %194 : vector<1x1xf32>
    %196 = arith.divf %191, %195 : vector<1x1xf32>
    %cst_47 = arith.constant 0.000000e+00 : f32
    %197 = vector.broadcast %cst_47 : f32 to vector<1x1xf32>
    %198 = arith.select %193, %196, %197 : vector<1x1xi1>, vector<1x1xf32>
    %199 = arith.addf %1, %198 : vector<1x1xf32>
    %cst_48 = arith.constant 1.000000e+00 : f32
    %cst_49 = arith.constant 0.000000e+00 : f32
    %200 = vector.broadcast %cst_48 : f32 to vector<1x1xf32>
    %201 = vector.broadcast %cst_49 : f32 to vector<1x1xf32>
    %202 = arith.select %193, %200, %201 : vector<1x1xi1>, vector<1x1xf32>
    %203 = arith.addf %2, %202 : vector<1x1xf32>
    %c1 = arith.constant 1 : index
    %c0_50 = arith.constant 0 : index
    %c0_51 = arith.constant 0 : index
    %204 = vector.load %arg2[%c1, %c0_50, %c0_51] : memref<2x6x64xf32, #tpu.memory_space<vmem>>, vector<1x6x64xf32>
    %205 = vector.shape_cast %204 : vector<1x6x64xf32> to vector<6x64xf32>
    %c1_52 = arith.constant 1 : index
    %c0_53 = arith.constant 0 : index
    %c0_54 = arith.constant 0 : index
    %206 = vector.load %arg3[%c1_52, %c0_53, %c0_54] : memref<2x8x5xf32, #tpu.memory_space<vmem>>, vector<1x8x5xf32>
    %207 = vector.shape_cast %206 : vector<1x8x5xf32> to vector<8x5xf32>
    %c1_55 = arith.constant 1 : index
    %208 = memref.load %arg1[%c1_55] : memref<2xi32, #tpu.memory_space<smem>>
    %209 = vector.extract_strided_slice %205 {offsets = [0, 0], sizes = [1, 64], strides = [1, 1]} : vector<6x64xf32> to vector<1x64xf32>
    %210 = vector.extract_strided_slice %205 {offsets = [1, 0], sizes = [1, 64], strides = [1, 1]} : vector<6x64xf32> to vector<1x64xf32>
    %211 = vector.extract_strided_slice %205 {offsets = [2, 0], sizes = [1, 64], strides = [1, 1]} : vector<6x64xf32> to vector<1x64xf32>
    %212 = vector.extract_strided_slice %205 {offsets = [3, 0], sizes = [1, 64], strides = [1, 1]} : vector<6x64xf32> to vector<1x64xf32>
    %213 = vector.extract_strided_slice %205 {offsets = [4, 0], sizes = [1, 64], strides = [1, 1]} : vector<6x64xf32> to vector<1x64xf32>
    %214 = vector.extract_strided_slice %205 {offsets = [5, 0], sizes = [1, 64], strides = [1, 1]} : vector<6x64xf32> to vector<1x64xf32>
    %cst_56 = arith.constant 5.000000e-01 : f32
    %215 = vector.broadcast %cst_56 : f32 to vector<1x64xf32>
    %216 = arith.mulf %215, %211 : vector<1x64xf32>
    %217 = arith.subf %209, %216 : vector<1x64xf32>
    %cst_57 = arith.constant 5.000000e-01 : f32
    %218 = vector.broadcast %cst_57 : f32 to vector<1x64xf32>
    %219 = arith.mulf %218, %212 : vector<1x64xf32>
    %220 = arith.subf %210, %219 : vector<1x64xf32>
    %cst_58 = arith.constant 5.000000e-01 : f32
    %221 = vector.broadcast %cst_58 : f32 to vector<1x64xf32>
    %222 = arith.mulf %221, %211 : vector<1x64xf32>
    %223 = arith.addf %209, %222 : vector<1x64xf32>
    %cst_59 = arith.constant 5.000000e-01 : f32
    %224 = vector.broadcast %cst_59 : f32 to vector<1x64xf32>
    %225 = arith.mulf %224, %212 : vector<1x64xf32>
    %226 = arith.addf %210, %225 : vector<1x64xf32>
    %227 = arith.mulf %211, %212 : vector<1x64xf32>
    %228 = vector.extract_strided_slice %207 {offsets = [0, 0], sizes = [8, 1], strides = [1, 1]} : vector<8x5xf32> to vector<8x1xf32>
    %229 = vector.extract_strided_slice %207 {offsets = [0, 1], sizes = [8, 1], strides = [1, 1]} : vector<8x5xf32> to vector<8x1xf32>
    %230 = vector.extract_strided_slice %207 {offsets = [0, 2], sizes = [8, 1], strides = [1, 1]} : vector<8x5xf32> to vector<8x1xf32>
    %231 = vector.extract_strided_slice %207 {offsets = [0, 3], sizes = [8, 1], strides = [1, 1]} : vector<8x5xf32> to vector<8x1xf32>
    %232 = arith.subf %230, %228 : vector<8x1xf32>
    %233 = arith.subf %231, %229 : vector<8x1xf32>
    %234 = arith.mulf %232, %233 : vector<8x1xf32>
    %235 = vector.broadcast %223 : vector<1x64xf32> to vector<8x64xf32>
    %236 = vector.broadcast %230 : vector<8x1xf32> to vector<8x64xf32>
    %237 = arith.minimumf %235, %236 : vector<8x64xf32>
    %238 = vector.broadcast %217 : vector<1x64xf32> to vector<8x64xf32>
    %239 = vector.broadcast %228 : vector<8x1xf32> to vector<8x64xf32>
    %240 = arith.maximumf %238, %239 : vector<8x64xf32>
    %241 = arith.subf %237, %240 : vector<8x64xf32>
    %cst_60 = arith.constant 0.000000e+00 : f32
    %242 = vector.broadcast %cst_60 : f32 to vector<8x64xf32>
    %243 = arith.maximumf %241, %242 : vector<8x64xf32>
    %244 = vector.broadcast %226 : vector<1x64xf32> to vector<8x64xf32>
    %245 = vector.broadcast %231 : vector<8x1xf32> to vector<8x64xf32>
    %246 = arith.minimumf %244, %245 : vector<8x64xf32>
    %247 = vector.broadcast %220 : vector<1x64xf32> to vector<8x64xf32>
    %248 = vector.broadcast %229 : vector<8x1xf32> to vector<8x64xf32>
    %249 = arith.maximumf %247, %248 : vector<8x64xf32>
    %250 = arith.subf %246, %249 : vector<8x64xf32>
    %cst_61 = arith.constant 0.000000e+00 : f32
    %251 = vector.broadcast %cst_61 : f32 to vector<8x64xf32>
    %252 = arith.maximumf %250, %251 : vector<8x64xf32>
    %253 = arith.mulf %243, %252 : vector<8x64xf32>
    %254 = vector.broadcast %227 : vector<1x64xf32> to vector<8x64xf32>
    %255 = vector.broadcast %234 : vector<8x1xf32> to vector<8x64xf32>
    %256 = arith.addf %254, %255 : vector<8x64xf32>
    %257 = arith.subf %256, %253 : vector<8x64xf32>
    %cst_62 = arith.constant 0.000000e+00 : f32
    %258 = vector.broadcast %cst_62 : f32 to vector<8x64xf32>
    %259 = arith.cmpf ogt, %257, %258 : vector<8x64xf32>
    %260 = arith.divf %253, %257 : vector<8x64xf32>
    %cst_63 = arith.constant 0.000000e+00 : f32
    %261 = vector.broadcast %cst_63 : f32 to vector<8x64xf32>
    %262 = arith.select %259, %260, %261 : vector<8x64xi1>, vector<8x64xf32>
    %263 = tpu.iota {dimensions = array<i32: 0>} : vector<8x64xi32>
    %264 = vector.broadcast %208 : i32 to vector<8x64xi32>
    %265 = arith.cmpi slt, %263, %264 : vector<8x64xi32>
    %cst_64 = arith.constant -1.000000e+00 : f32
    %266 = vector.broadcast %cst_64 : f32 to vector<8x64xf32>
    %267 = arith.select %265, %262, %266 : vector<8x64xi1>, vector<8x64xf32>
    %cst_65 = arith.constant dense<0xFF800000> : vector<64xf32>
    %268 = vector.multi_reduction <maximumf>, %267, %cst_65 [0] : vector<8x64xf32> to vector<64xf32>
    %269 = vector.shape_cast %268 : vector<64xf32> to vector<1x64xf32>
    %cst_66 = arith.constant 3.000000e-01 : f32
    %270 = vector.broadcast %cst_66 : f32 to vector<1x64xf32>
    %271 = arith.cmpf ogt, %269, %270 : vector<1x64xf32>
    %272 = arith.extui %271 : vector<1x64xi1> to vector<1x64xi32>
    %273 = arith.sitofp %272 : vector<1x64xi32> to vector<1x64xf32>
    %274 = vector.broadcast %269 : vector<1x64xf32> to vector<8x64xf32>
    %275 = arith.cmpf oeq, %267, %274 : vector<8x64xf32>
    %c8_i32_67 = arith.constant 8 : i32
    %276 = vector.broadcast %c8_i32_67 : i32 to vector<8x64xi32>
    %277 = arith.select %275, %263, %276 : vector<8x64xi1>, vector<8x64xi32>
    %cst_68 = arith.constant dense<2147483647> : vector<64xi32>
    %278 = vector.multi_reduction <minsi>, %277, %cst_68 [0] : vector<8x64xi32> to vector<64xi32>
    %279 = vector.shape_cast %278 : vector<64xi32> to vector<1x64xi32>
    %280 = vector.broadcast %279 : vector<1x64xi32> to vector<8x64xi32>
    %281 = arith.cmpi eq, %263, %280 : vector<8x64xi32>
    %c1_69 = arith.constant 1 : index
    %c0_70 = arith.constant 0 : index
    %c0_71 = arith.constant 0 : index
    %282 = vector.load %arg4[%c1_69, %c0_70, %c0_71] : memref<2x8x8xf32, #tpu.memory_space<vmem>>, vector<1x8x8xf32>
    %283 = vector.shape_cast %282 : vector<1x8x8xf32> to vector<8x8xf32>
    %284 = arith.extui %281 : vector<8x64xi1> to vector<8x64xi32>
    %285 = arith.sitofp %284 : vector<8x64xi32> to vector<8x64xf32>
    %cst_72 = arith.constant dense<0.000000e+00> : vector<8x64xf32>
    %286 = tpu.matmul %283, %285, %cst_72 {dimension_numbers = #tpu.dot_dimension_numbers<[1], [0], [0], [1], [0, 0, 1, 1], [], []>} : vector<8x8xf32>, vector<8x64xf32>, vector<8x64xf32> -> vector<8x64xf32>
    %287 = vector.extract_strided_slice %286 {offsets = [0, 0], sizes = [1, 64], strides = [1, 1]} : vector<8x64xf32> to vector<1x64xf32>
    %288 = vector.extract_strided_slice %286 {offsets = [1, 0], sizes = [1, 64], strides = [1, 1]} : vector<8x64xf32> to vector<1x64xf32>
    %289 = vector.extract_strided_slice %286 {offsets = [2, 0], sizes = [1, 64], strides = [1, 1]} : vector<8x64xf32> to vector<1x64xf32>
    %290 = vector.extract_strided_slice %286 {offsets = [3, 0], sizes = [1, 64], strides = [1, 1]} : vector<8x64xf32> to vector<1x64xf32>
    %291 = vector.extract_strided_slice %286 {offsets = [4, 0], sizes = [1, 64], strides = [1, 1]} : vector<8x64xf32> to vector<1x64xf32>
    %cst_73 = arith.constant 5.000000e-01 : f32
    %292 = vector.broadcast %cst_73 : f32 to vector<1x64xf32>
    %293 = arith.mulf %292, %213 : vector<1x64xf32>
    %294 = math.tanh %293 : vector<1x64xf32>
    %cst_74 = arith.constant 1.000000e+00 : f32
    %295 = vector.broadcast %cst_74 : f32 to vector<1x64xf32>
    %296 = arith.addf %294, %295 : vector<1x64xf32>
    %cst_75 = arith.constant 5.000000e-01 : f32
    %297 = vector.broadcast %cst_75 : f32 to vector<1x64xf32>
    %298 = arith.mulf %297, %296 : vector<1x64xf32>
    %299 = arith.mulf %273, %298 : vector<1x64xf32>
    %cst_76 = arith.constant 1.000000e+00 : f32
    %300 = vector.broadcast %cst_76 : f32 to vector<1x64xf32>
    %301 = arith.subf %300, %273 : vector<1x64xf32>
    %cst_77 = arith.constant 1.000000e+00 : f32
    %302 = vector.broadcast %cst_77 : f32 to vector<1x64xf32>
    %303 = arith.subf %302, %298 : vector<1x64xf32>
    %304 = arith.mulf %301, %303 : vector<1x64xf32>
    %305 = arith.addf %299, %304 : vector<1x64xf32>
    %cst_78 = arith.constant 9.99999996E-13 : f32
    %306 = vector.broadcast %cst_78 : f32 to vector<1x64xf32>
    %307 = arith.maximumf %305, %306 : vector<1x64xf32>
    %308 = math.log %307 : vector<1x64xf32>
    %cst_79 = arith.constant 0.000000e+00 : f32
    %309 = vector.broadcast %cst_79 : f32 to vector<1x64xf32>
    %310 = arith.subf %309, %308 : vector<1x64xf32>
    %cst_80 = arith.constant 1.000000e+00 : f32
    %311 = vector.broadcast %cst_80 : f32 to vector<1x64xf32>
    %312 = arith.subf %311, %305 : vector<1x64xf32>
    %cst_81 = arith.constant 2.500000e-01 : f32
    %313 = vector.broadcast %cst_81 : f32 to vector<1x64xf32>
    %314 = arith.mulf %313, %312 : vector<1x64xf32>
    %315 = arith.mulf %314, %312 : vector<1x64xf32>
    %316 = arith.mulf %315, %310 : vector<1x64xf32>
    %317 = vector.shape_cast %316 : vector<1x64xf32> to vector<1x1x64xf32>
    %cst_82 = arith.constant dense<0.000000e+00> : vector<1xf32>
    %318 = vector.multi_reduction <add>, %317, %cst_82 [1, 2] : vector<1x1x64xf32> to vector<1xf32>
    %319 = vector.shape_cast %318 : vector<1xf32> to vector<1x1x1xf32>
    %320 = vector.extract %319[0, 0, 0] : f32 from vector<1x1x1xf32>
    %321 = vector.broadcast %320 : f32 to vector<1x1xf32>
    %322 = arith.addf %121, %321 : vector<1x1xf32>
    %323 = arith.maximumf %217, %287 : vector<1x64xf32>
    %324 = arith.maximumf %220, %288 : vector<1x64xf32>
    %325 = arith.minimumf %223, %289 : vector<1x64xf32>
    %326 = arith.minimumf %226, %290 : vector<1x64xf32>
    %327 = arith.cmpf ogt, %325, %323 : vector<1x64xf32>
    %328 = arith.cmpf ogt, %326, %324 : vector<1x64xf32>
    %329 = arith.andi %327, %328 : vector<1x64xi1>
    %330 = arith.subf %325, %323 : vector<1x64xf32>
    %331 = arith.subf %326, %324 : vector<1x64xf32>
    %332 = arith.mulf %330, %331 : vector<1x64xf32>
    %cst_83 = arith.constant 0.000000e+00 : f32
    %333 = vector.broadcast %cst_83 : f32 to vector<1x64xf32>
    %334 = arith.select %329, %332, %333 : vector<1x64xi1>, vector<1x64xf32>
    %335 = arith.subf %289, %287 : vector<1x64xf32>
    %336 = arith.subf %290, %288 : vector<1x64xf32>
    %337 = arith.mulf %335, %336 : vector<1x64xf32>
    %338 = arith.addf %227, %337 : vector<1x64xf32>
    %339 = arith.subf %338, %334 : vector<1x64xf32>
    %cst_84 = arith.constant 1.000000e-07 : f32
    %340 = vector.broadcast %cst_84 : f32 to vector<1x64xf32>
    %341 = arith.addf %339, %340 : vector<1x64xf32>
    %342 = arith.divf %334, %341 : vector<1x64xf32>
    %343 = arith.minimumf %217, %287 : vector<1x64xf32>
    %344 = arith.minimumf %220, %288 : vector<1x64xf32>
    %345 = arith.maximumf %223, %289 : vector<1x64xf32>
    %346 = arith.maximumf %226, %290 : vector<1x64xf32>
    %347 = arith.subf %345, %343 : vector<1x64xf32>
    %348 = arith.mulf %347, %347 : vector<1x64xf32>
    %349 = arith.subf %346, %344 : vector<1x64xf32>
    %350 = arith.mulf %349, %349 : vector<1x64xf32>
    %351 = arith.addf %348, %350 : vector<1x64xf32>
    %cst_85 = arith.constant 1.000000e-07 : f32
    %352 = vector.broadcast %cst_85 : f32 to vector<1x64xf32>
    %353 = arith.addf %351, %352 : vector<1x64xf32>
    %354 = arith.addf %217, %223 : vector<1x64xf32>
    %355 = arith.subf %354, %287 : vector<1x64xf32>
    %356 = arith.subf %355, %289 : vector<1x64xf32>
    %357 = arith.mulf %356, %356 : vector<1x64xf32>
    %358 = arith.addf %220, %226 : vector<1x64xf32>
    %359 = arith.subf %358, %288 : vector<1x64xf32>
    %360 = arith.subf %359, %290 : vector<1x64xf32>
    %361 = arith.mulf %360, %360 : vector<1x64xf32>
    %362 = arith.addf %357, %361 : vector<1x64xf32>
    %cst_86 = arith.constant 2.500000e-01 : f32
    %363 = vector.broadcast %cst_86 : f32 to vector<1x64xf32>
    %364 = arith.mulf %362, %363 : vector<1x64xf32>
    %cst_87 = arith.constant 1.000000e+00 : f32
    %365 = vector.broadcast %cst_87 : f32 to vector<1x64xf32>
    %366 = arith.subf %365, %342 : vector<1x64xf32>
    %367 = arith.divf %364, %353 : vector<1x64xf32>
    %368 = arith.addf %366, %367 : vector<1x64xf32>
    %369 = arith.subf %291, %214 : vector<1x64xf32>
    %370 = arith.mulf %369, %369 : vector<1x64xf32>
    %cst_88 = arith.constant 0.405284733 : f32
    %371 = vector.broadcast %cst_88 : f32 to vector<1x64xf32>
    %372 = arith.mulf %371, %370 : vector<1x64xf32>
    %cst_89 = arith.constant 1.000000e+00 : f32
    %373 = vector.broadcast %cst_89 : f32 to vector<1x64xf32>
    %374 = arith.subf %373, %342 : vector<1x64xf32>
    %375 = arith.addf %374, %372 : vector<1x64xf32>
    %cst_90 = arith.constant 1.000000e-07 : f32
    %376 = vector.broadcast %cst_90 : f32 to vector<1x64xf32>
    %377 = arith.addf %375, %376 : vector<1x64xf32>
    %378 = arith.divf %372, %377 : vector<1x64xf32>
    %379 = arith.mulf %378, %372 : vector<1x64xf32>
    %380 = arith.addf %368, %379 : vector<1x64xf32>
    %381 = vector.shape_cast %273 : vector<1x64xf32> to vector<1x1x64xf32>
    %cst_91 = arith.constant dense<0.000000e+00> : vector<1xf32>
    %382 = vector.multi_reduction <add>, %381, %cst_91 [1, 2] : vector<1x1x64xf32> to vector<1xf32>
    %383 = vector.shape_cast %382 : vector<1xf32> to vector<1x1x1xf32>
    %384 = vector.extract %383[0, 0, 0] : f32 from vector<1x1x1xf32>
    %385 = vector.broadcast %384 : f32 to vector<1x1xf32>
    %cst_92 = arith.constant 0.000000e+00 : f32
    %386 = vector.broadcast %cst_92 : f32 to vector<1x64xf32>
    %387 = arith.select %271, %380, %386 : vector<1x64xi1>, vector<1x64xf32>
    %388 = vector.shape_cast %387 : vector<1x64xf32> to vector<1x1x64xf32>
    %cst_93 = arith.constant dense<0.000000e+00> : vector<1xf32>
    %389 = vector.multi_reduction <add>, %388, %cst_93 [1, 2] : vector<1x1x64xf32> to vector<1xf32>
    %390 = vector.shape_cast %389 : vector<1xf32> to vector<1x1x1xf32>
    %391 = vector.extract %390[0, 0, 0] : f32 from vector<1x1x1xf32>
    %392 = vector.broadcast %391 : f32 to vector<1x1xf32>
    %cst_94 = arith.constant 0.000000e+00 : f32
    %393 = vector.broadcast %cst_94 : f32 to vector<1x1xf32>
    %394 = arith.cmpf ogt, %385, %393 : vector<1x1xf32>
    %cst_95 = arith.constant 1.000000e+00 : f32
    %395 = vector.broadcast %cst_95 : f32 to vector<1x1xf32>
    %396 = arith.maximumf %385, %395 : vector<1x1xf32>
    %397 = arith.divf %392, %396 : vector<1x1xf32>
    %cst_96 = arith.constant 0.000000e+00 : f32
    %398 = vector.broadcast %cst_96 : f32 to vector<1x1xf32>
    %399 = arith.select %394, %397, %398 : vector<1x1xi1>, vector<1x1xf32>
    %400 = arith.addf %199, %399 : vector<1x1xf32>
    %cst_97 = arith.constant 1.000000e+00 : f32
    %cst_98 = arith.constant 0.000000e+00 : f32
    %401 = vector.broadcast %cst_97 : f32 to vector<1x1xf32>
    %402 = vector.broadcast %cst_98 : f32 to vector<1x1xf32>
    %403 = arith.select %394, %401, %402 : vector<1x1xi1>, vector<1x1xf32>
    %404 = arith.addf %203, %403 : vector<1x1xf32>
    %cst_99 = arith.constant 1.280000e+02 : f32
    %405 = vector.broadcast %cst_99 : f32 to vector<1x1xf32>
    %406 = arith.divf %322, %405 : vector<1x1xf32>
    %cst_100 = arith.constant 0.000000e+00 : f32
    %407 = vector.broadcast %cst_100 : f32 to vector<1x1xf32>
    %408 = arith.cmpf ogt, %404, %407 : vector<1x1xf32>
    %cst_101 = arith.constant 1.000000e+00 : f32
    %409 = vector.broadcast %cst_101 : f32 to vector<1x1xf32>
    %410 = arith.maximumf %404, %409 : vector<1x1xf32>
    %411 = arith.divf %400, %410 : vector<1x1xf32>
    %cst_102 = arith.constant 0.000000e+00 : f32
    %412 = vector.broadcast %cst_102 : f32 to vector<1x1xf32>
    %413 = arith.select %408, %411, %412 : vector<1x1xi1>, vector<1x1xf32>
    %cst_103 = arith.constant 3.000000e+00 : f32
    %414 = vector.broadcast %cst_103 : f32 to vector<1x1xf32>
    %415 = arith.mulf %414, %406 : vector<1x1xf32>
    %cst_104 = arith.constant 7.500000e+00 : f32
    %416 = vector.broadcast %cst_104 : f32 to vector<1x1xf32>
    %417 = arith.mulf %416, %413 : vector<1x1xf32>
    %418 = arith.addf %415, %417 : vector<1x1xf32>
    %c0_105 = arith.constant 0 : index
    %c0_106 = arith.constant 0 : index
    %419 = vector.load %arg5[%c0_105, %c0_106] : memref<1x1xf32, #tpu.memory_space<vmem>>, vector<1x1xf32>
    tpu.vector_store %arg5[%c0_105, %c0_106], %418 {strides = array<i32>} : memref<1x1xf32, #tpu.memory_space<vmem>>, vector<1x1xf32>,
    return
  }
  func.func @transform_0(%arg0: i32, %arg1: memref<2xi32, #tpu.memory_space<smem>>) -> (i32, i32, i32) {
    %c0_i32 = arith.constant 0 : i32
    %c0_i32_0 = arith.constant 0 : i32
    %c0_i32_1 = arith.constant 0 : i32
    %c0_i32_2 = arith.constant 0 : i32
    return %c0_i32, %c0_i32_0, %c0_i32_1 : i32, i32, i32
  }
  func.func @transform_1(%arg0: i32, %arg1: memref<2xi32, #tpu.memory_space<smem>>) -> (i32, i32, i32) {
    %c0_i32 = arith.constant 0 : i32
    %c0_i32_0 = arith.constant 0 : i32
    %c0_i32_1 = arith.constant 0 : i32
    %c0_i32_2 = arith.constant 0 : i32
    return %c0_i32, %c0_i32_0, %c0_i32_1 : i32, i32, i32
  }
  func.func @transform_2(%arg0: i32, %arg1: memref<2xi32, #tpu.memory_space<smem>>) -> (i32, i32, i32) {
    %c0_i32 = arith.constant 0 : i32
    %c0_i32_0 = arith.constant 0 : i32
    %c0_i32_1 = arith.constant 0 : i32
    %c0_i32_2 = arith.constant 0 : i32
    return %c0_i32, %c0_i32_0, %c0_i32_1 : i32, i32, i32
  }
  func.func @transform_3(%arg0: i32, %arg1: memref<2xi32, #tpu.memory_space<smem>>) -> (i32, i32) {
    %c0_i32 = arith.constant 0 : i32
    %c0_i32_0 = arith.constant 0 : i32
    %c0_i32_1 = arith.constant 0 : i32
    return %c0_i32, %c0_i32_0 : i32, i32
  }
}

module attributes {stable_mosaic.version = 11 : i64} {
  func.func @_detection_loss_kernel(%arg0: i32, %arg1: memref<2xi32, #tpu.memory_space<smem>>, %arg2: memref<2x6x64xf32, #tpu.memory_space<vmem>>, %arg3: memref<2x8x5xf32, #tpu.memory_space<vmem>>, %arg4: memref<2x8x8xf32, #tpu.memory_space<vmem>>, %arg5: memref<1x1xf32, #tpu.memory_space<vmem>>) attributes {dimension_semantics = [#tpu.dimension_semantics<arbitrary>], iteration_bounds = array<i64: 1>, scalar_prefetch = 1 : i64, scratch_operands = 0 : i64, tpu.core_type = #tpu.core_type<tc>, window_params = [{pipeline_mode = #tpu.pipeline_mode<synchronous>, transform_indices = @transform_0, window_bounds = array<i64: 2, 6, 64>}, {pipeline_mode = #tpu.pipeline_mode<synchronous>, transform_indices = @transform_1, window_bounds = array<i64: 2, 8, 5>}, {pipeline_mode = #tpu.pipeline_mode<synchronous>, transform_indices = @transform_2, window_bounds = array<i64: 2, 8, 8>}, {pipeline_mode = #tpu.pipeline_mode<synchronous>, transform_indices = @transform_3, window_bounds = array<i64: 1, 1>}]} {
    %cst = arith.constant 0.000000e+00 : f32
    %0 = vector.broadcast %cst : f32 to vector<1x1xf32>
    %cst_0 = arith.constant 0.000000e+00 : f32
    %1 = vector.broadcast %cst_0 : f32 to vector<1x1xf32>
    %cst_1 = arith.constant 0.000000e+00 : f32
    %2 = vector.broadcast %cst_1 : f32 to vector<1x1xf32>
    %c0 = arith.constant 0 : index
    %c0_2 = arith.constant 0 : index
    %c0_3 = arith.constant 0 : index
    %3 = vector.load %arg2[%c0, %c0_2, %c0_3] : memref<2x6x64xf32, #tpu.memory_space<vmem>>, vector<1x6x64xf32>
    %4 = vector.shape_cast %3 : vector<1x6x64xf32> to vector<6x64xf32>
    %c0_4 = arith.constant 0 : index
    %c0_5 = arith.constant 0 : index
    %c0_6 = arith.constant 0 : index
    %5 = vector.load %arg3[%c0_4, %c0_5, %c0_6] : memref<2x8x5xf32, #tpu.memory_space<vmem>>, vector<1x8x5xf32>
    %6 = vector.shape_cast %5 : vector<1x8x5xf32> to vector<8x5xf32>
    %c0_7 = arith.constant 0 : index
    %7 = memref.load %arg1[%c0_7] : memref<2xi32, #tpu.memory_space<smem>>
    %8 = vector.extract_strided_slice %4 {offsets = [0, 0], sizes = [1, 64], strides = [1, 1]} : vector<6x64xf32> to vector<1x64xf32>
    %9 = vector.extract_strided_slice %4 {offsets = [1, 0], sizes = [1, 64], strides = [1, 1]} : vector<6x64xf32> to vector<1x64xf32>
    %10 = vector.extract_strided_slice %4 {offsets = [2, 0], sizes = [1, 64], strides = [1, 1]} : vector<6x64xf32> to vector<1x64xf32>
    %11 = vector.extract_strided_slice %4 {offsets = [3, 0], sizes = [1, 64], strides = [1, 1]} : vector<6x64xf32> to vector<1x64xf32>
    %12 = vector.extract_strided_slice %4 {offsets = [4, 0], sizes = [1, 64], strides = [1, 1]} : vector<6x64xf32> to vector<1x64xf32>
    %13 = vector.extract_strided_slice %4 {offsets = [5, 0], sizes = [1, 64], strides = [1, 1]} : vector<6x64xf32> to vector<1x64xf32>
    %cst_8 = arith.constant 5.000000e-01 : f32
    %14 = vector.broadcast %cst_8 : f32 to vector<1x64xf32>
    %15 = arith.mulf %14, %10 : vector<1x64xf32>
    %16 = arith.subf %8, %15 : vector<1x64xf32>
    %cst_9 = arith.constant 5.000000e-01 : f32
    %17 = vector.broadcast %cst_9 : f32 to vector<1x64xf32>
    %18 = arith.mulf %17, %11 : vector<1x64xf32>
    %19 = arith.subf %9, %18 : vector<1x64xf32>
    %cst_10 = arith.constant 5.000000e-01 : f32
    %20 = vector.broadcast %cst_10 : f32 to vector<1x64xf32>
    %21 = arith.mulf %20, %10 : vector<1x64xf32>
    %22 = arith.addf %8, %21 : vector<1x64xf32>
    %cst_11 = arith.constant 5.000000e-01 : f32
    %23 = vector.broadcast %cst_11 : f32 to vector<1x64xf32>
    %24 = arith.mulf %23, %11 : vector<1x64xf32>
    %25 = arith.addf %9, %24 : vector<1x64xf32>
    %26 = arith.mulf %10, %11 : vector<1x64xf32>
    %27 = vector.extract_strided_slice %6 {offsets = [0, 0], sizes = [8, 1], strides = [1, 1]} : vector<8x5xf32> to vector<8x1xf32>
    %28 = vector.extract_strided_slice %6 {offsets = [0, 1], sizes = [8, 1], strides = [1, 1]} : vector<8x5xf32> to vector<8x1xf32>
    %29 = vector.extract_strided_slice %6 {offsets = [0, 2], sizes = [8, 1], strides = [1, 1]} : vector<8x5xf32> to vector<8x1xf32>
    %30 = vector.extract_strided_slice %6 {offsets = [0, 3], sizes = [8, 1], strides = [1, 1]} : vector<8x5xf32> to vector<8x1xf32>
    %31 = vector.extract_strided_slice %6 {offsets = [0, 4], sizes = [8, 1], strides = [1, 1]} : vector<8x5xf32> to vector<8x1xf32>
    %32 = arith.subf %29, %27 : vector<8x1xf32>
    %33 = arith.subf %30, %28 : vector<8x1xf32>
    %34 = arith.mulf %32, %33 : vector<8x1xf32>
    %35 = vector.broadcast %22 : vector<1x64xf32> to vector<8x64xf32>
    %36 = vector.broadcast %29 : vector<8x1xf32> to vector<8x64xf32>
    %37 = arith.minimumf %35, %36 : vector<8x64xf32>
    %38 = vector.broadcast %16 : vector<1x64xf32> to vector<8x64xf32>
    %39 = vector.broadcast %27 : vector<8x1xf32> to vector<8x64xf32>
    %40 = arith.maximumf %38, %39 : vector<8x64xf32>
    %41 = arith.subf %37, %40 : vector<8x64xf32>
    %cst_12 = arith.constant 0.000000e+00 : f32
    %42 = vector.broadcast %cst_12 : f32 to vector<8x64xf32>
    %43 = arith.maximumf %41, %42 : vector<8x64xf32>
    %44 = vector.broadcast %25 : vector<1x64xf32> to vector<8x64xf32>
    %45 = vector.broadcast %30 : vector<8x1xf32> to vector<8x64xf32>
    %46 = arith.minimumf %44, %45 : vector<8x64xf32>
    %47 = vector.broadcast %19 : vector<1x64xf32> to vector<8x64xf32>
    %48 = vector.broadcast %28 : vector<8x1xf32> to vector<8x64xf32>
    %49 = arith.maximumf %47, %48 : vector<8x64xf32>
    %50 = arith.subf %46, %49 : vector<8x64xf32>
    %cst_13 = arith.constant 0.000000e+00 : f32
    %51 = vector.broadcast %cst_13 : f32 to vector<8x64xf32>
    %52 = arith.maximumf %50, %51 : vector<8x64xf32>
    %53 = arith.mulf %43, %52 : vector<8x64xf32>
    %54 = vector.broadcast %26 : vector<1x64xf32> to vector<8x64xf32>
    %55 = vector.broadcast %34 : vector<8x1xf32> to vector<8x64xf32>
    %56 = arith.addf %54, %55 : vector<8x64xf32>
    %57 = arith.subf %56, %53 : vector<8x64xf32>
    %cst_14 = arith.constant 0.000000e+00 : f32
    %58 = vector.broadcast %cst_14 : f32 to vector<8x64xf32>
    %59 = arith.cmpf ogt, %57, %58 : vector<8x64xf32>
    %60 = arith.divf %53, %57 : vector<8x64xf32>
    %cst_15 = arith.constant 0.000000e+00 : f32
    %61 = vector.broadcast %cst_15 : f32 to vector<8x64xf32>
    %62 = arith.select %59, %60, %61 : vector<8x64xi1>, vector<8x64xf32>
    %63 = tpu.iota {dimensions = array<i32: 0>} : vector<8x64xi32>
    %64 = vector.broadcast %7 : i32 to vector<8x64xi32>
    %65 = arith.cmpi slt, %63, %64 : vector<8x64xi32>
    %cst_16 = arith.constant -1.000000e+00 : f32
    %66 = vector.broadcast %cst_16 : f32 to vector<8x64xf32>
    %67 = arith.select %65, %62, %66 : vector<8x64xi1>, vector<8x64xf32>
    %cst_17 = arith.constant dense<0xFF800000> : vector<64xf32>
    %68 = vector.multi_reduction <maximumf>, %67, %cst_17 [0] : vector<8x64xf32> to vector<64xf32>
    %69 = vector.shape_cast %68 : vector<64xf32> to vector<1x64xf32>
    %cst_18 = arith.constant 3.000000e-01 : f32
    %70 = vector.broadcast %cst_18 : f32 to vector<1x64xf32>
    %71 = arith.cmpf ogt, %69, %70 : vector<1x64xf32>
    %72 = arith.extui %71 : vector<1x64xi1> to vector<1x64xi32>
    %73 = arith.sitofp %72 : vector<1x64xi32> to vector<1x64xf32>
    %74 = vector.broadcast %69 : vector<1x64xf32> to vector<8x64xf32>
    %75 = arith.cmpf oeq, %67, %74 : vector<8x64xf32>
    %c8_i32 = arith.constant 8 : i32
    %76 = vector.broadcast %c8_i32 : i32 to vector<8x64xi32>
    %77 = arith.select %75, %63, %76 : vector<8x64xi1>, vector<8x64xi32>
    %cst_19 = arith.constant dense<2147483647> : vector<64xi32>
    %78 = vector.multi_reduction <minsi>, %77, %cst_19 [0] : vector<8x64xi32> to vector<64xi32>
    %79 = vector.shape_cast %78 : vector<64xi32> to vector<1x64xi32>
    %80 = vector.broadcast %79 : vector<1x64xi32> to vector<8x64xi32>
    %81 = arith.cmpi eq, %63, %80 : vector<8x64xi32>
    %cst_20 = arith.constant 0.000000e+00 : f32
    %82 = vector.shape_cast %27 : vector<8x1xf32> to vector<8x1xf32>
    %83 = vector.broadcast %82 : vector<8x1xf32> to vector<8x64xf32>
    %84 = vector.broadcast %cst_20 : f32 to vector<8x64xf32>
    %85 = arith.select %81, %83, %84 : vector<8x64xi1>, vector<8x64xf32>
    %cst_21 = arith.constant dense<0.000000e+00> : vector<64xf32>
    %86 = vector.multi_reduction <add>, %85, %cst_21 [0] : vector<8x64xf32> to vector<64xf32>
    %87 = vector.shape_cast %86 : vector<64xf32> to vector<1x64xf32>
    %cst_22 = arith.constant 0.000000e+00 : f32
    %88 = vector.shape_cast %28 : vector<8x1xf32> to vector<8x1xf32>
    %89 = vector.broadcast %88 : vector<8x1xf32> to vector<8x64xf32>
    %90 = vector.broadcast %cst_22 : f32 to vector<8x64xf32>
    %91 = arith.select %81, %89, %90 : vector<8x64xi1>, vector<8x64xf32>
    %cst_23 = arith.constant dense<0.000000e+00> : vector<64xf32>
    %92 = vector.multi_reduction <add>, %91, %cst_23 [0] : vector<8x64xf32> to vector<64xf32>
    %93 = vector.shape_cast %92 : vector<64xf32> to vector<1x64xf32>
    %cst_24 = arith.constant 0.000000e+00 : f32
    %94 = vector.shape_cast %29 : vector<8x1xf32> to vector<8x1xf32>
    %95 = vector.broadcast %94 : vector<8x1xf32> to vector<8x64xf32>
    %96 = vector.broadcast %cst_24 : f32 to vector<8x64xf32>
    %97 = arith.select %81, %95, %96 : vector<8x64xi1>, vector<8x64xf32>
    %cst_25 = arith.constant dense<0.000000e+00> : vector<64xf32>
    %98 = vector.multi_reduction <add>, %97, %cst_25 [0] : vector<8x64xf32> to vector<64xf32>
    %99 = vector.shape_cast %98 : vector<64xf32> to vector<1x64xf32>
    %cst_26 = arith.constant 0.000000e+00 : f32
    %100 = vector.shape_cast %30 : vector<8x1xf32> to vector<8x1xf32>
    %101 = vector.broadcast %100 : vector<8x1xf32> to vector<8x64xf32>
    %102 = vector.broadcast %cst_26 : f32 to vector<8x64xf32>
    %103 = arith.select %81, %101, %102 : vector<8x64xi1>, vector<8x64xf32>
    %cst_27 = arith.constant dense<0.000000e+00> : vector<64xf32>
    %104 = vector.multi_reduction <add>, %103, %cst_27 [0] : vector<8x64xf32> to vector<64xf32>
    %105 = vector.shape_cast %104 : vector<64xf32> to vector<1x64xf32>
    %cst_28 = arith.constant 0.000000e+00 : f32
    %106 = vector.shape_cast %31 : vector<8x1xf32> to vector<8x1xf32>
    %107 = vector.broadcast %106 : vector<8x1xf32> to vector<8x64xf32>
    %108 = vector.broadcast %cst_28 : f32 to vector<8x64xf32>
    %109 = arith.select %81, %107, %108 : vector<8x64xi1>, vector<8x64xf32>
    %cst_29 = arith.constant dense<0.000000e+00> : vector<64xf32>
    %110 = vector.multi_reduction <add>, %109, %cst_29 [0] : vector<8x64xf32> to vector<64xf32>
    %111 = vector.shape_cast %110 : vector<64xf32> to vector<1x64xf32>
    %cst_30 = arith.constant 5.000000e-01 : f32
    %112 = vector.broadcast %cst_30 : f32 to vector<1x64xf32>
    %113 = arith.mulf %112, %12 : vector<1x64xf32>
    %114 = math.tanh %113 : vector<1x64xf32>
    %cst_31 = arith.constant 1.000000e+00 : f32
    %115 = vector.broadcast %cst_31 : f32 to vector<1x64xf32>
    %116 = arith.addf %114, %115 : vector<1x64xf32>
    %cst_32 = arith.constant 5.000000e-01 : f32
    %117 = vector.broadcast %cst_32 : f32 to vector<1x64xf32>
    %118 = arith.mulf %117, %116 : vector<1x64xf32>
    %119 = arith.mulf %73, %118 : vector<1x64xf32>
    %cst_33 = arith.constant 1.000000e+00 : f32
    %120 = vector.broadcast %cst_33 : f32 to vector<1x64xf32>
    %121 = arith.subf %120, %73 : vector<1x64xf32>
    %cst_34 = arith.constant 1.000000e+00 : f32
    %122 = vector.broadcast %cst_34 : f32 to vector<1x64xf32>
    %123 = arith.subf %122, %118 : vector<1x64xf32>
    %124 = arith.mulf %121, %123 : vector<1x64xf32>
    %125 = arith.addf %119, %124 : vector<1x64xf32>
    %cst_35 = arith.constant 9.99999996E-13 : f32
    %126 = vector.broadcast %cst_35 : f32 to vector<1x64xf32>
    %127 = arith.maximumf %125, %126 : vector<1x64xf32>
    %128 = math.log %127 : vector<1x64xf32>
    %cst_36 = arith.constant 0.000000e+00 : f32
    %129 = vector.broadcast %cst_36 : f32 to vector<1x64xf32>
    %130 = arith.subf %129, %128 : vector<1x64xf32>
    %cst_37 = arith.constant 1.000000e+00 : f32
    %131 = vector.broadcast %cst_37 : f32 to vector<1x64xf32>
    %132 = arith.subf %131, %125 : vector<1x64xf32>
    %cst_38 = arith.constant 2.500000e-01 : f32
    %133 = vector.broadcast %cst_38 : f32 to vector<1x64xf32>
    %134 = arith.mulf %133, %132 : vector<1x64xf32>
    %135 = arith.mulf %134, %132 : vector<1x64xf32>
    %136 = arith.mulf %135, %130 : vector<1x64xf32>
    %137 = vector.shape_cast %136 : vector<1x64xf32> to vector<1x1x64xf32>
    %cst_39 = arith.constant dense<0.000000e+00> : vector<1xf32>
    %138 = vector.multi_reduction <add>, %137, %cst_39 [1, 2] : vector<1x1x64xf32> to vector<1xf32>
    %139 = vector.shape_cast %138 : vector<1xf32> to vector<1x1x1xf32>
    %140 = vector.extract %139[0, 0, 0] : f32 from vector<1x1x1xf32>
    %141 = vector.broadcast %140 : f32 to vector<1x1xf32>
    %142 = arith.addf %0, %141 : vector<1x1xf32>
    %143 = arith.maximumf %16, %87 : vector<1x64xf32>
    %144 = arith.maximumf %19, %93 : vector<1x64xf32>
    %145 = arith.minimumf %22, %99 : vector<1x64xf32>
    %146 = arith.minimumf %25, %105 : vector<1x64xf32>
    %147 = arith.cmpf ogt, %145, %143 : vector<1x64xf32>
    %148 = arith.cmpf ogt, %146, %144 : vector<1x64xf32>
    %149 = arith.andi %147, %148 : vector<1x64xi1>
    %150 = arith.subf %145, %143 : vector<1x64xf32>
    %151 = arith.subf %146, %144 : vector<1x64xf32>
    %152 = arith.mulf %150, %151 : vector<1x64xf32>
    %cst_40 = arith.constant 0.000000e+00 : f32
    %153 = vector.broadcast %cst_40 : f32 to vector<1x64xf32>
    %154 = arith.select %149, %152, %153 : vector<1x64xi1>, vector<1x64xf32>
    %155 = arith.subf %99, %87 : vector<1x64xf32>
    %156 = arith.subf %105, %93 : vector<1x64xf32>
    %157 = arith.mulf %155, %156 : vector<1x64xf32>
    %158 = arith.addf %26, %157 : vector<1x64xf32>
    %159 = arith.subf %158, %154 : vector<1x64xf32>
    %cst_41 = arith.constant 1.000000e-07 : f32
    %160 = vector.broadcast %cst_41 : f32 to vector<1x64xf32>
    %161 = arith.addf %159, %160 : vector<1x64xf32>
    %162 = arith.divf %154, %161 : vector<1x64xf32>
    %163 = arith.minimumf %16, %87 : vector<1x64xf32>
    %164 = arith.minimumf %19, %93 : vector<1x64xf32>
    %165 = arith.maximumf %22, %99 : vector<1x64xf32>
    %166 = arith.maximumf %25, %105 : vector<1x64xf32>
    %167 = arith.subf %165, %163 : vector<1x64xf32>
    %168 = arith.mulf %167, %167 : vector<1x64xf32>
    %169 = arith.subf %166, %164 : vector<1x64xf32>
    %170 = arith.mulf %169, %169 : vector<1x64xf32>
    %171 = arith.addf %168, %170 : vector<1x64xf32>
    %cst_42 = arith.constant 1.000000e-07 : f32
    %172 = vector.broadcast %cst_42 : f32 to vector<1x64xf32>
    %173 = arith.addf %171, %172 : vector<1x64xf32>
    %174 = arith.addf %16, %22 : vector<1x64xf32>
    %175 = arith.subf %174, %87 : vector<1x64xf32>
    %176 = arith.subf %175, %99 : vector<1x64xf32>
    %177 = arith.mulf %176, %176 : vector<1x64xf32>
    %178 = arith.addf %19, %25 : vector<1x64xf32>
    %179 = arith.subf %178, %93 : vector<1x64xf32>
    %180 = arith.subf %179, %105 : vector<1x64xf32>
    %181 = arith.mulf %180, %180 : vector<1x64xf32>
    %182 = arith.addf %177, %181 : vector<1x64xf32>
    %cst_43 = arith.constant 2.500000e-01 : f32
    %183 = vector.broadcast %cst_43 : f32 to vector<1x64xf32>
    %184 = arith.mulf %182, %183 : vector<1x64xf32>
    %cst_44 = arith.constant 1.000000e+00 : f32
    %185 = vector.broadcast %cst_44 : f32 to vector<1x64xf32>
    %186 = arith.subf %185, %162 : vector<1x64xf32>
    %187 = arith.divf %184, %173 : vector<1x64xf32>
    %188 = arith.addf %186, %187 : vector<1x64xf32>
    %189 = arith.subf %111, %13 : vector<1x64xf32>
    %190 = arith.mulf %189, %189 : vector<1x64xf32>
    %cst_45 = arith.constant 0.405284733 : f32
    %191 = vector.broadcast %cst_45 : f32 to vector<1x64xf32>
    %192 = arith.mulf %191, %190 : vector<1x64xf32>
    %cst_46 = arith.constant 1.000000e+00 : f32
    %193 = vector.broadcast %cst_46 : f32 to vector<1x64xf32>
    %194 = arith.subf %193, %162 : vector<1x64xf32>
    %195 = arith.addf %194, %192 : vector<1x64xf32>
    %cst_47 = arith.constant 1.000000e-07 : f32
    %196 = vector.broadcast %cst_47 : f32 to vector<1x64xf32>
    %197 = arith.addf %195, %196 : vector<1x64xf32>
    %198 = arith.divf %192, %197 : vector<1x64xf32>
    %199 = arith.mulf %198, %192 : vector<1x64xf32>
    %200 = arith.addf %188, %199 : vector<1x64xf32>
    %201 = vector.shape_cast %73 : vector<1x64xf32> to vector<1x1x64xf32>
    %cst_48 = arith.constant dense<0.000000e+00> : vector<1xf32>
    %202 = vector.multi_reduction <add>, %201, %cst_48 [1, 2] : vector<1x1x64xf32> to vector<1xf32>
    %203 = vector.shape_cast %202 : vector<1xf32> to vector<1x1x1xf32>
    %204 = vector.extract %203[0, 0, 0] : f32 from vector<1x1x1xf32>
    %205 = vector.broadcast %204 : f32 to vector<1x1xf32>
    %cst_49 = arith.constant 0.000000e+00 : f32
    %206 = vector.broadcast %cst_49 : f32 to vector<1x64xf32>
    %207 = arith.select %71, %200, %206 : vector<1x64xi1>, vector<1x64xf32>
    %208 = vector.shape_cast %207 : vector<1x64xf32> to vector<1x1x64xf32>
    %cst_50 = arith.constant dense<0.000000e+00> : vector<1xf32>
    %209 = vector.multi_reduction <add>, %208, %cst_50 [1, 2] : vector<1x1x64xf32> to vector<1xf32>
    %210 = vector.shape_cast %209 : vector<1xf32> to vector<1x1x1xf32>
    %211 = vector.extract %210[0, 0, 0] : f32 from vector<1x1x1xf32>
    %212 = vector.broadcast %211 : f32 to vector<1x1xf32>
    %cst_51 = arith.constant 0.000000e+00 : f32
    %213 = vector.broadcast %cst_51 : f32 to vector<1x1xf32>
    %214 = arith.cmpf ogt, %205, %213 : vector<1x1xf32>
    %cst_52 = arith.constant 1.000000e+00 : f32
    %215 = vector.broadcast %cst_52 : f32 to vector<1x1xf32>
    %216 = arith.maximumf %205, %215 : vector<1x1xf32>
    %217 = arith.divf %212, %216 : vector<1x1xf32>
    %cst_53 = arith.constant 0.000000e+00 : f32
    %218 = vector.broadcast %cst_53 : f32 to vector<1x1xf32>
    %219 = arith.select %214, %217, %218 : vector<1x1xi1>, vector<1x1xf32>
    %220 = arith.addf %1, %219 : vector<1x1xf32>
    %cst_54 = arith.constant 1.000000e+00 : f32
    %cst_55 = arith.constant 0.000000e+00 : f32
    %221 = vector.broadcast %cst_54 : f32 to vector<1x1xf32>
    %222 = vector.broadcast %cst_55 : f32 to vector<1x1xf32>
    %223 = arith.select %214, %221, %222 : vector<1x1xi1>, vector<1x1xf32>
    %224 = arith.addf %2, %223 : vector<1x1xf32>
    %c1 = arith.constant 1 : index
    %c0_56 = arith.constant 0 : index
    %c0_57 = arith.constant 0 : index
    %225 = vector.load %arg2[%c1, %c0_56, %c0_57] : memref<2x6x64xf32, #tpu.memory_space<vmem>>, vector<1x6x64xf32>
    %226 = vector.shape_cast %225 : vector<1x6x64xf32> to vector<6x64xf32>
    %c1_58 = arith.constant 1 : index
    %c0_59 = arith.constant 0 : index
    %c0_60 = arith.constant 0 : index
    %227 = vector.load %arg3[%c1_58, %c0_59, %c0_60] : memref<2x8x5xf32, #tpu.memory_space<vmem>>, vector<1x8x5xf32>
    %228 = vector.shape_cast %227 : vector<1x8x5xf32> to vector<8x5xf32>
    %c1_61 = arith.constant 1 : index
    %229 = memref.load %arg1[%c1_61] : memref<2xi32, #tpu.memory_space<smem>>
    %230 = vector.extract_strided_slice %226 {offsets = [0, 0], sizes = [1, 64], strides = [1, 1]} : vector<6x64xf32> to vector<1x64xf32>
    %231 = vector.extract_strided_slice %226 {offsets = [1, 0], sizes = [1, 64], strides = [1, 1]} : vector<6x64xf32> to vector<1x64xf32>
    %232 = vector.extract_strided_slice %226 {offsets = [2, 0], sizes = [1, 64], strides = [1, 1]} : vector<6x64xf32> to vector<1x64xf32>
    %233 = vector.extract_strided_slice %226 {offsets = [3, 0], sizes = [1, 64], strides = [1, 1]} : vector<6x64xf32> to vector<1x64xf32>
    %234 = vector.extract_strided_slice %226 {offsets = [4, 0], sizes = [1, 64], strides = [1, 1]} : vector<6x64xf32> to vector<1x64xf32>
    %235 = vector.extract_strided_slice %226 {offsets = [5, 0], sizes = [1, 64], strides = [1, 1]} : vector<6x64xf32> to vector<1x64xf32>
    %cst_62 = arith.constant 5.000000e-01 : f32
    %236 = vector.broadcast %cst_62 : f32 to vector<1x64xf32>
    %237 = arith.mulf %236, %232 : vector<1x64xf32>
    %238 = arith.subf %230, %237 : vector<1x64xf32>
    %cst_63 = arith.constant 5.000000e-01 : f32
    %239 = vector.broadcast %cst_63 : f32 to vector<1x64xf32>
    %240 = arith.mulf %239, %233 : vector<1x64xf32>
    %241 = arith.subf %231, %240 : vector<1x64xf32>
    %cst_64 = arith.constant 5.000000e-01 : f32
    %242 = vector.broadcast %cst_64 : f32 to vector<1x64xf32>
    %243 = arith.mulf %242, %232 : vector<1x64xf32>
    %244 = arith.addf %230, %243 : vector<1x64xf32>
    %cst_65 = arith.constant 5.000000e-01 : f32
    %245 = vector.broadcast %cst_65 : f32 to vector<1x64xf32>
    %246 = arith.mulf %245, %233 : vector<1x64xf32>
    %247 = arith.addf %231, %246 : vector<1x64xf32>
    %248 = arith.mulf %232, %233 : vector<1x64xf32>
    %249 = vector.extract_strided_slice %228 {offsets = [0, 0], sizes = [8, 1], strides = [1, 1]} : vector<8x5xf32> to vector<8x1xf32>
    %250 = vector.extract_strided_slice %228 {offsets = [0, 1], sizes = [8, 1], strides = [1, 1]} : vector<8x5xf32> to vector<8x1xf32>
    %251 = vector.extract_strided_slice %228 {offsets = [0, 2], sizes = [8, 1], strides = [1, 1]} : vector<8x5xf32> to vector<8x1xf32>
    %252 = vector.extract_strided_slice %228 {offsets = [0, 3], sizes = [8, 1], strides = [1, 1]} : vector<8x5xf32> to vector<8x1xf32>
    %253 = vector.extract_strided_slice %228 {offsets = [0, 4], sizes = [8, 1], strides = [1, 1]} : vector<8x5xf32> to vector<8x1xf32>
    %254 = arith.subf %251, %249 : vector<8x1xf32>
    %255 = arith.subf %252, %250 : vector<8x1xf32>
    %256 = arith.mulf %254, %255 : vector<8x1xf32>
    %257 = vector.broadcast %244 : vector<1x64xf32> to vector<8x64xf32>
    %258 = vector.broadcast %251 : vector<8x1xf32> to vector<8x64xf32>
    %259 = arith.minimumf %257, %258 : vector<8x64xf32>
    %260 = vector.broadcast %238 : vector<1x64xf32> to vector<8x64xf32>
    %261 = vector.broadcast %249 : vector<8x1xf32> to vector<8x64xf32>
    %262 = arith.maximumf %260, %261 : vector<8x64xf32>
    %263 = arith.subf %259, %262 : vector<8x64xf32>
    %cst_66 = arith.constant 0.000000e+00 : f32
    %264 = vector.broadcast %cst_66 : f32 to vector<8x64xf32>
    %265 = arith.maximumf %263, %264 : vector<8x64xf32>
    %266 = vector.broadcast %247 : vector<1x64xf32> to vector<8x64xf32>
    %267 = vector.broadcast %252 : vector<8x1xf32> to vector<8x64xf32>
    %268 = arith.minimumf %266, %267 : vector<8x64xf32>
    %269 = vector.broadcast %241 : vector<1x64xf32> to vector<8x64xf32>
    %270 = vector.broadcast %250 : vector<8x1xf32> to vector<8x64xf32>
    %271 = arith.maximumf %269, %270 : vector<8x64xf32>
    %272 = arith.subf %268, %271 : vector<8x64xf32>
    %cst_67 = arith.constant 0.000000e+00 : f32
    %273 = vector.broadcast %cst_67 : f32 to vector<8x64xf32>
    %274 = arith.maximumf %272, %273 : vector<8x64xf32>
    %275 = arith.mulf %265, %274 : vector<8x64xf32>
    %276 = vector.broadcast %248 : vector<1x64xf32> to vector<8x64xf32>
    %277 = vector.broadcast %256 : vector<8x1xf32> to vector<8x64xf32>
    %278 = arith.addf %276, %277 : vector<8x64xf32>
    %279 = arith.subf %278, %275 : vector<8x64xf32>
    %cst_68 = arith.constant 0.000000e+00 : f32
    %280 = vector.broadcast %cst_68 : f32 to vector<8x64xf32>
    %281 = arith.cmpf ogt, %279, %280 : vector<8x64xf32>
    %282 = arith.divf %275, %279 : vector<8x64xf32>
    %cst_69 = arith.constant 0.000000e+00 : f32
    %283 = vector.broadcast %cst_69 : f32 to vector<8x64xf32>
    %284 = arith.select %281, %282, %283 : vector<8x64xi1>, vector<8x64xf32>
    %285 = tpu.iota {dimensions = array<i32: 0>} : vector<8x64xi32>
    %286 = vector.broadcast %229 : i32 to vector<8x64xi32>
    %287 = arith.cmpi slt, %285, %286 : vector<8x64xi32>
    %cst_70 = arith.constant -1.000000e+00 : f32
    %288 = vector.broadcast %cst_70 : f32 to vector<8x64xf32>
    %289 = arith.select %287, %284, %288 : vector<8x64xi1>, vector<8x64xf32>
    %cst_71 = arith.constant dense<0xFF800000> : vector<64xf32>
    %290 = vector.multi_reduction <maximumf>, %289, %cst_71 [0] : vector<8x64xf32> to vector<64xf32>
    %291 = vector.shape_cast %290 : vector<64xf32> to vector<1x64xf32>
    %cst_72 = arith.constant 3.000000e-01 : f32
    %292 = vector.broadcast %cst_72 : f32 to vector<1x64xf32>
    %293 = arith.cmpf ogt, %291, %292 : vector<1x64xf32>
    %294 = arith.extui %293 : vector<1x64xi1> to vector<1x64xi32>
    %295 = arith.sitofp %294 : vector<1x64xi32> to vector<1x64xf32>
    %296 = vector.broadcast %291 : vector<1x64xf32> to vector<8x64xf32>
    %297 = arith.cmpf oeq, %289, %296 : vector<8x64xf32>
    %c8_i32_73 = arith.constant 8 : i32
    %298 = vector.broadcast %c8_i32_73 : i32 to vector<8x64xi32>
    %299 = arith.select %297, %285, %298 : vector<8x64xi1>, vector<8x64xi32>
    %cst_74 = arith.constant dense<2147483647> : vector<64xi32>
    %300 = vector.multi_reduction <minsi>, %299, %cst_74 [0] : vector<8x64xi32> to vector<64xi32>
    %301 = vector.shape_cast %300 : vector<64xi32> to vector<1x64xi32>
    %302 = vector.broadcast %301 : vector<1x64xi32> to vector<8x64xi32>
    %303 = arith.cmpi eq, %285, %302 : vector<8x64xi32>
    %cst_75 = arith.constant 0.000000e+00 : f32
    %304 = vector.shape_cast %249 : vector<8x1xf32> to vector<8x1xf32>
    %305 = vector.broadcast %304 : vector<8x1xf32> to vector<8x64xf32>
    %306 = vector.broadcast %cst_75 : f32 to vector<8x64xf32>
    %307 = arith.select %303, %305, %306 : vector<8x64xi1>, vector<8x64xf32>
    %cst_76 = arith.constant dense<0.000000e+00> : vector<64xf32>
    %308 = vector.multi_reduction <add>, %307, %cst_76 [0] : vector<8x64xf32> to vector<64xf32>
    %309 = vector.shape_cast %308 : vector<64xf32> to vector<1x64xf32>
    %cst_77 = arith.constant 0.000000e+00 : f32
    %310 = vector.shape_cast %250 : vector<8x1xf32> to vector<8x1xf32>
    %311 = vector.broadcast %310 : vector<8x1xf32> to vector<8x64xf32>
    %312 = vector.broadcast %cst_77 : f32 to vector<8x64xf32>
    %313 = arith.select %303, %311, %312 : vector<8x64xi1>, vector<8x64xf32>
    %cst_78 = arith.constant dense<0.000000e+00> : vector<64xf32>
    %314 = vector.multi_reduction <add>, %313, %cst_78 [0] : vector<8x64xf32> to vector<64xf32>
    %315 = vector.shape_cast %314 : vector<64xf32> to vector<1x64xf32>
    %cst_79 = arith.constant 0.000000e+00 : f32
    %316 = vector.shape_cast %251 : vector<8x1xf32> to vector<8x1xf32>
    %317 = vector.broadcast %316 : vector<8x1xf32> to vector<8x64xf32>
    %318 = vector.broadcast %cst_79 : f32 to vector<8x64xf32>
    %319 = arith.select %303, %317, %318 : vector<8x64xi1>, vector<8x64xf32>
    %cst_80 = arith.constant dense<0.000000e+00> : vector<64xf32>
    %320 = vector.multi_reduction <add>, %319, %cst_80 [0] : vector<8x64xf32> to vector<64xf32>
    %321 = vector.shape_cast %320 : vector<64xf32> to vector<1x64xf32>
    %cst_81 = arith.constant 0.000000e+00 : f32
    %322 = vector.shape_cast %252 : vector<8x1xf32> to vector<8x1xf32>
    %323 = vector.broadcast %322 : vector<8x1xf32> to vector<8x64xf32>
    %324 = vector.broadcast %cst_81 : f32 to vector<8x64xf32>
    %325 = arith.select %303, %323, %324 : vector<8x64xi1>, vector<8x64xf32>
    %cst_82 = arith.constant dense<0.000000e+00> : vector<64xf32>
    %326 = vector.multi_reduction <add>, %325, %cst_82 [0] : vector<8x64xf32> to vector<64xf32>
    %327 = vector.shape_cast %326 : vector<64xf32> to vector<1x64xf32>
    %cst_83 = arith.constant 0.000000e+00 : f32
    %328 = vector.shape_cast %253 : vector<8x1xf32> to vector<8x1xf32>
    %329 = vector.broadcast %328 : vector<8x1xf32> to vector<8x64xf32>
    %330 = vector.broadcast %cst_83 : f32 to vector<8x64xf32>
    %331 = arith.select %303, %329, %330 : vector<8x64xi1>, vector<8x64xf32>
    %cst_84 = arith.constant dense<0.000000e+00> : vector<64xf32>
    %332 = vector.multi_reduction <add>, %331, %cst_84 [0] : vector<8x64xf32> to vector<64xf32>
    %333 = vector.shape_cast %332 : vector<64xf32> to vector<1x64xf32>
    %cst_85 = arith.constant 5.000000e-01 : f32
    %334 = vector.broadcast %cst_85 : f32 to vector<1x64xf32>
    %335 = arith.mulf %334, %234 : vector<1x64xf32>
    %336 = math.tanh %335 : vector<1x64xf32>
    %cst_86 = arith.constant 1.000000e+00 : f32
    %337 = vector.broadcast %cst_86 : f32 to vector<1x64xf32>
    %338 = arith.addf %336, %337 : vector<1x64xf32>
    %cst_87 = arith.constant 5.000000e-01 : f32
    %339 = vector.broadcast %cst_87 : f32 to vector<1x64xf32>
    %340 = arith.mulf %339, %338 : vector<1x64xf32>
    %341 = arith.mulf %295, %340 : vector<1x64xf32>
    %cst_88 = arith.constant 1.000000e+00 : f32
    %342 = vector.broadcast %cst_88 : f32 to vector<1x64xf32>
    %343 = arith.subf %342, %295 : vector<1x64xf32>
    %cst_89 = arith.constant 1.000000e+00 : f32
    %344 = vector.broadcast %cst_89 : f32 to vector<1x64xf32>
    %345 = arith.subf %344, %340 : vector<1x64xf32>
    %346 = arith.mulf %343, %345 : vector<1x64xf32>
    %347 = arith.addf %341, %346 : vector<1x64xf32>
    %cst_90 = arith.constant 9.99999996E-13 : f32
    %348 = vector.broadcast %cst_90 : f32 to vector<1x64xf32>
    %349 = arith.maximumf %347, %348 : vector<1x64xf32>
    %350 = math.log %349 : vector<1x64xf32>
    %cst_91 = arith.constant 0.000000e+00 : f32
    %351 = vector.broadcast %cst_91 : f32 to vector<1x64xf32>
    %352 = arith.subf %351, %350 : vector<1x64xf32>
    %cst_92 = arith.constant 1.000000e+00 : f32
    %353 = vector.broadcast %cst_92 : f32 to vector<1x64xf32>
    %354 = arith.subf %353, %347 : vector<1x64xf32>
    %cst_93 = arith.constant 2.500000e-01 : f32
    %355 = vector.broadcast %cst_93 : f32 to vector<1x64xf32>
    %356 = arith.mulf %355, %354 : vector<1x64xf32>
    %357 = arith.mulf %356, %354 : vector<1x64xf32>
    %358 = arith.mulf %357, %352 : vector<1x64xf32>
    %359 = vector.shape_cast %358 : vector<1x64xf32> to vector<1x1x64xf32>
    %cst_94 = arith.constant dense<0.000000e+00> : vector<1xf32>
    %360 = vector.multi_reduction <add>, %359, %cst_94 [1, 2] : vector<1x1x64xf32> to vector<1xf32>
    %361 = vector.shape_cast %360 : vector<1xf32> to vector<1x1x1xf32>
    %362 = vector.extract %361[0, 0, 0] : f32 from vector<1x1x1xf32>
    %363 = vector.broadcast %362 : f32 to vector<1x1xf32>
    %364 = arith.addf %142, %363 : vector<1x1xf32>
    %365 = arith.maximumf %238, %309 : vector<1x64xf32>
    %366 = arith.maximumf %241, %315 : vector<1x64xf32>
    %367 = arith.minimumf %244, %321 : vector<1x64xf32>
    %368 = arith.minimumf %247, %327 : vector<1x64xf32>
    %369 = arith.cmpf ogt, %367, %365 : vector<1x64xf32>
    %370 = arith.cmpf ogt, %368, %366 : vector<1x64xf32>
    %371 = arith.andi %369, %370 : vector<1x64xi1>
    %372 = arith.subf %367, %365 : vector<1x64xf32>
    %373 = arith.subf %368, %366 : vector<1x64xf32>
    %374 = arith.mulf %372, %373 : vector<1x64xf32>
    %cst_95 = arith.constant 0.000000e+00 : f32
    %375 = vector.broadcast %cst_95 : f32 to vector<1x64xf32>
    %376 = arith.select %371, %374, %375 : vector<1x64xi1>, vector<1x64xf32>
    %377 = arith.subf %321, %309 : vector<1x64xf32>
    %378 = arith.subf %327, %315 : vector<1x64xf32>
    %379 = arith.mulf %377, %378 : vector<1x64xf32>
    %380 = arith.addf %248, %379 : vector<1x64xf32>
    %381 = arith.subf %380, %376 : vector<1x64xf32>
    %cst_96 = arith.constant 1.000000e-07 : f32
    %382 = vector.broadcast %cst_96 : f32 to vector<1x64xf32>
    %383 = arith.addf %381, %382 : vector<1x64xf32>
    %384 = arith.divf %376, %383 : vector<1x64xf32>
    %385 = arith.minimumf %238, %309 : vector<1x64xf32>
    %386 = arith.minimumf %241, %315 : vector<1x64xf32>
    %387 = arith.maximumf %244, %321 : vector<1x64xf32>
    %388 = arith.maximumf %247, %327 : vector<1x64xf32>
    %389 = arith.subf %387, %385 : vector<1x64xf32>
    %390 = arith.mulf %389, %389 : vector<1x64xf32>
    %391 = arith.subf %388, %386 : vector<1x64xf32>
    %392 = arith.mulf %391, %391 : vector<1x64xf32>
    %393 = arith.addf %390, %392 : vector<1x64xf32>
    %cst_97 = arith.constant 1.000000e-07 : f32
    %394 = vector.broadcast %cst_97 : f32 to vector<1x64xf32>
    %395 = arith.addf %393, %394 : vector<1x64xf32>
    %396 = arith.addf %238, %244 : vector<1x64xf32>
    %397 = arith.subf %396, %309 : vector<1x64xf32>
    %398 = arith.subf %397, %321 : vector<1x64xf32>
    %399 = arith.mulf %398, %398 : vector<1x64xf32>
    %400 = arith.addf %241, %247 : vector<1x64xf32>
    %401 = arith.subf %400, %315 : vector<1x64xf32>
    %402 = arith.subf %401, %327 : vector<1x64xf32>
    %403 = arith.mulf %402, %402 : vector<1x64xf32>
    %404 = arith.addf %399, %403 : vector<1x64xf32>
    %cst_98 = arith.constant 2.500000e-01 : f32
    %405 = vector.broadcast %cst_98 : f32 to vector<1x64xf32>
    %406 = arith.mulf %404, %405 : vector<1x64xf32>
    %cst_99 = arith.constant 1.000000e+00 : f32
    %407 = vector.broadcast %cst_99 : f32 to vector<1x64xf32>
    %408 = arith.subf %407, %384 : vector<1x64xf32>
    %409 = arith.divf %406, %395 : vector<1x64xf32>
    %410 = arith.addf %408, %409 : vector<1x64xf32>
    %411 = arith.subf %333, %235 : vector<1x64xf32>
    %412 = arith.mulf %411, %411 : vector<1x64xf32>
    %cst_100 = arith.constant 0.405284733 : f32
    %413 = vector.broadcast %cst_100 : f32 to vector<1x64xf32>
    %414 = arith.mulf %413, %412 : vector<1x64xf32>
    %cst_101 = arith.constant 1.000000e+00 : f32
    %415 = vector.broadcast %cst_101 : f32 to vector<1x64xf32>
    %416 = arith.subf %415, %384 : vector<1x64xf32>
    %417 = arith.addf %416, %414 : vector<1x64xf32>
    %cst_102 = arith.constant 1.000000e-07 : f32
    %418 = vector.broadcast %cst_102 : f32 to vector<1x64xf32>
    %419 = arith.addf %417, %418 : vector<1x64xf32>
    %420 = arith.divf %414, %419 : vector<1x64xf32>
    %421 = arith.mulf %420, %414 : vector<1x64xf32>
    %422 = arith.addf %410, %421 : vector<1x64xf32>
    %423 = vector.shape_cast %295 : vector<1x64xf32> to vector<1x1x64xf32>
    %cst_103 = arith.constant dense<0.000000e+00> : vector<1xf32>
    %424 = vector.multi_reduction <add>, %423, %cst_103 [1, 2] : vector<1x1x64xf32> to vector<1xf32>
    %425 = vector.shape_cast %424 : vector<1xf32> to vector<1x1x1xf32>
    %426 = vector.extract %425[0, 0, 0] : f32 from vector<1x1x1xf32>
    %427 = vector.broadcast %426 : f32 to vector<1x1xf32>
    %cst_104 = arith.constant 0.000000e+00 : f32
    %428 = vector.broadcast %cst_104 : f32 to vector<1x64xf32>
    %429 = arith.select %293, %422, %428 : vector<1x64xi1>, vector<1x64xf32>
    %430 = vector.shape_cast %429 : vector<1x64xf32> to vector<1x1x64xf32>
    %cst_105 = arith.constant dense<0.000000e+00> : vector<1xf32>
    %431 = vector.multi_reduction <add>, %430, %cst_105 [1, 2] : vector<1x1x64xf32> to vector<1xf32>
    %432 = vector.shape_cast %431 : vector<1xf32> to vector<1x1x1xf32>
    %433 = vector.extract %432[0, 0, 0] : f32 from vector<1x1x1xf32>
    %434 = vector.broadcast %433 : f32 to vector<1x1xf32>
    %cst_106 = arith.constant 0.000000e+00 : f32
    %435 = vector.broadcast %cst_106 : f32 to vector<1x1xf32>
    %436 = arith.cmpf ogt, %427, %435 : vector<1x1xf32>
    %cst_107 = arith.constant 1.000000e+00 : f32
    %437 = vector.broadcast %cst_107 : f32 to vector<1x1xf32>
    %438 = arith.maximumf %427, %437 : vector<1x1xf32>
    %439 = arith.divf %434, %438 : vector<1x1xf32>
    %cst_108 = arith.constant 0.000000e+00 : f32
    %440 = vector.broadcast %cst_108 : f32 to vector<1x1xf32>
    %441 = arith.select %436, %439, %440 : vector<1x1xi1>, vector<1x1xf32>
    %442 = arith.addf %220, %441 : vector<1x1xf32>
    %cst_109 = arith.constant 1.000000e+00 : f32
    %cst_110 = arith.constant 0.000000e+00 : f32
    %443 = vector.broadcast %cst_109 : f32 to vector<1x1xf32>
    %444 = vector.broadcast %cst_110 : f32 to vector<1x1xf32>
    %445 = arith.select %436, %443, %444 : vector<1x1xi1>, vector<1x1xf32>
    %446 = arith.addf %224, %445 : vector<1x1xf32>
    %cst_111 = arith.constant 1.280000e+02 : f32
    %447 = vector.broadcast %cst_111 : f32 to vector<1x1xf32>
    %448 = arith.divf %364, %447 : vector<1x1xf32>
    %cst_112 = arith.constant 0.000000e+00 : f32
    %449 = vector.broadcast %cst_112 : f32 to vector<1x1xf32>
    %450 = arith.cmpf ogt, %446, %449 : vector<1x1xf32>
    %cst_113 = arith.constant 1.000000e+00 : f32
    %451 = vector.broadcast %cst_113 : f32 to vector<1x1xf32>
    %452 = arith.maximumf %446, %451 : vector<1x1xf32>
    %453 = arith.divf %442, %452 : vector<1x1xf32>
    %cst_114 = arith.constant 0.000000e+00 : f32
    %454 = vector.broadcast %cst_114 : f32 to vector<1x1xf32>
    %455 = arith.select %450, %453, %454 : vector<1x1xi1>, vector<1x1xf32>
    %cst_115 = arith.constant 3.000000e+00 : f32
    %456 = vector.broadcast %cst_115 : f32 to vector<1x1xf32>
    %457 = arith.mulf %456, %448 : vector<1x1xf32>
    %cst_116 = arith.constant 7.500000e+00 : f32
    %458 = vector.broadcast %cst_116 : f32 to vector<1x1xf32>
    %459 = arith.mulf %458, %455 : vector<1x1xf32>
    %460 = arith.addf %457, %459 : vector<1x1xf32>
    %c0_117 = arith.constant 0 : index
    %c0_118 = arith.constant 0 : index
    %461 = vector.load %arg5[%c0_117, %c0_118] : memref<1x1xf32, #tpu.memory_space<vmem>>, vector<1x1xf32>
    tpu.vector_store %arg5[%c0_117, %c0_118], %460 {strides = array<i32>} : memref<1x1xf32, #tpu.memory_space<vmem>>, vector<1x1xf32>,
    return
  }
  func.func @transform_0(%arg0: i32, %arg1: memref<2xi32, #tpu.memory_space<smem>>) -> (i32, i32, i32) {
    %c0_i32 = arith.constant 0 : i32
    %c0_i32_0 = arith.constant 0 : i32
    %c0_i32_1 = arith.constant 0 : i32
    %c0_i32_2 = arith.constant 0 : i32
    return %c0_i32, %c0_i32_0, %c0_i32_1 : i32, i32, i32
  }
  func.func @transform_1(%arg0: i32, %arg1: memref<2xi32, #tpu.memory_space<smem>>) -> (i32, i32, i32) {
    %c0_i32 = arith.constant 0 : i32
    %c0_i32_0 = arith.constant 0 : i32
    %c0_i32_1 = arith.constant 0 : i32
    %c0_i32_2 = arith.constant 0 : i32
    return %c0_i32, %c0_i32_0, %c0_i32_1 : i32, i32, i32
  }
  func.func @transform_2(%arg0: i32, %arg1: memref<2xi32, #tpu.memory_space<smem>>) -> (i32, i32, i32) {
    %c0_i32 = arith.constant 0 : i32
    %c0_i32_0 = arith.constant 0 : i32
    %c0_i32_1 = arith.constant 0 : i32
    %c0_i32_2 = arith.constant 0 : i32
    return %c0_i32, %c0_i32_0, %c0_i32_1 : i32, i32, i32
  }
  func.func @transform_3(%arg0: i32, %arg1: memref<2xi32, #tpu.memory_space<smem>>) -> (i32, i32) {
    %c0_i32 = arith.constant 0 : i32
    %c0_i32_0 = arith.constant 0 : i32
    %c0_i32_1 = arith.constant 0 : i32
    return %c0_i32, %c0_i32_0 : i32, i32
  }
}

</mosaic_0001>

<llo_original>
// kernel: tpu_custom_call.1
$region0: #{tpu_custom_call.1}
  #allocation0 [shape = 'u32[]', space=smem, size = 0x4, offset = 0x4, fixed_abs, tag = 'smem constant byte address 0x4 - core index']
  #allocation1 [shape = 'u32[144,128]{1,0:T(1,128)}', space=vmem, size = 0x12000, scoped, tag = 'internal scratch']
  #allocation2 [shape = 's32[1]{0}', space=sflag, size = 0x4, scoped, tag = 'scoped memory for tpu_custom_call.1']
  #allocation3 [shape = 'u8[512]{0}', space=smem, size = 0x200, scoped, tag = 'prefetched SMEM operand 0']
  %s0 = inlined_call_operand.vmem [shape: s32[2], index: 0, kind: input, shape index: {}]
  %s1 = inlined_call_operand.vmem [shape: f32[2,6,64], index: 1, kind: input, shape index: {}]
  %s2 = inlined_call_operand.vmem [shape: f32[2,8,5], index: 2, kind: input, shape index: {}]
  %s3 = inlined_call_operand.vmem [shape: f32[2,8,8], index: 3, kind: input, shape index: {}]
  %s4 = inlined_call_operand.hbm [shape: f32[1,1], index: 4, kind: output, shape index: {}]
  %s5 = sld [smem:[#allocation0]]
  $region22: #{tpu_custom_call.1} parent=0
    _
  %s7 = ssub.s32 1, %s5
  %s8 = scalar_select 0, %s7, %s5
  %s9 = sshll.u32 %s0, 4
  %s10 = int_to_ptr.vmem [resolvable:$true] %s9
  %12 = dma.vmem_to_smem %s10, 16, [#allocation3], [#allocation2]
  %13 = dma.done [#allocation2], 16
  %14 = sfence
  $region1: #{tpu_custom_call.1} parent=0
    #allocation4 [shape = 'u8[512]{0}', space=vmem, size = 0x400, scoped, tag = 'output window, operand 0, single buffered']
    #allocation5 [shape = 's32[1]{0}', space=sflag, size = 0x4, scoped, tag = 'scoped memory for tpu_custom_call.1']
    %15 = vsyncpa [#allocation5], 0
    // Predicated region
    $region2: #{tpu_custom_call.1} parent=1 // pred_check
      _
    $region3: #{tpu_custom_call.1} parent=1 // pred_check_branch
      %17 = sbr.rel (0) target = $region5
    $region4: #{tpu_custom_call.1} parent=1 // pred_region
      _
    $region5: #{tpu_custom_call.1} parent=1 // pred_fallthru
      _
    // Predicated region
    $region6: #{tpu_custom_call.1} parent=1 // pred_check
      _
    $region7: #{tpu_custom_call.1} parent=1 // pred_check_branch
      %19 = sbr.rel (0) target = $region9
    $region8: #{tpu_custom_call.1} parent=1 // pred_region
      _
    $region9: #{tpu_custom_call.1} parent=1 // pred_fallthru
      _
    // Predicated region
    $region10: #{tpu_custom_call.1} parent=1 // pred_check
      _
    $region11: #{tpu_custom_call.1} parent=1 // pred_check_branch
      %21 = sbr.rel (0) target = $region13
    $region12: #{tpu_custom_call.1} parent=1 // pred_region
      _
    $region13: #{tpu_custom_call.1} parent=1 // pred_fallthru
      _
    %v22 = vld [vmem:[%s1] sm:$0x3f]
    %v23 = vld [vmem:[%s2] sm:$0xff]
    %s24 = sld [smem:[#allocation3]]
    %v25 = vmul.f32 %v22, 0.5
    %v27 = vrot.slane %v25, 2
    %v29 = vsub.f32 %v22, %v27
    %v30 = vadd.f32 %v22, %v27
    %v32 = vrot.slane %v22, 1
    %v34 = vmul.f32 %v22, %v32
    %36 = vrot.lane.b32.xlu0 %v23, 2
    %v37 = vpop.permute.xlu0 %36
    %v39 = vsub.f32 %v23, %v37
    %41 = vrot.lane.b32.xlu0 %v39, 127
    %v42 = vpop.permute.xlu0 %41
    %v44 = vmul.f32 %v39, %v42
    %v45 = vlaneseq
    %v46 = vshrl.u32 %v45, 7
    %v47 = vsub.s32 0, %v46
    %v48 = vrot.slane %v30, %v47
    %49 = vset.pattern.permute.xlu0 2
    %50 = vperm.xlu0 %49, %v23
    %v51 = vpop.permute.xlu0 %50
    %v53 = vmin.f32 %v48, %v51
    %v54 = vlaneseq
    %v55 = vshrl.u32 %v54, 7
    %v56 = vsub.s32 0, %v55
    %v57 = vrot.slane %v29, %v56
    %58 = vset.pattern.permute.xlu0 0
    %59 = vperm.xlu0 %58, %v23
    %v60 = vpop.permute.xlu0 %59
    %v62 = vmax.f32 %v57, %v60
    %v63 = vsub.f32 %v53, %v62
    %v64 = vmax.f32 %v63, 0.0
    %v65 = vlaneseq
    %v66 = vshrl.u32 %v65, 7
    %v67 = vsub.s32 1, %v66
    %v68 = vrot.slane %v30, %v67
    %69 = vset.pattern.permute.xlu0 3
    %70 = vperm.xlu0 %69, %v23
    %v71 = vpop.permute.xlu0 %70
    %v73 = vmin.f32 %v68, %v71
    %v74 = vlaneseq
    %v75 = vshrl.u32 %v74, 7
    %v76 = vsub.s32 1, %v75
    %v77 = vrot.slane %v29, %v76
    %78 = vset.pattern.permute.xlu0 1
    %79 = vperm.xlu0 %78, %v23
    %v80 = vpop.permute.xlu0 %79
    %v82 = vmax.f32 %v77, %v80
    %v83 = vsub.f32 %v73, %v82
    %v84 = vmax.f32 %v83, 0.0
    %v85 = vmul.f32 %v64, %v84
    %v86 = vlaneseq
    %v87 = vshrl.u32 %v86, 7
    %v88 = vsub.s32 2, %v87
    %v89 = vrot.slane %v34, %v88
    %91 = vset.pattern.permute.xlu0 2
    %92 = vperm.xlu0 %91, %v44
    %v93 = vpop.permute.xlu0 %92
    %v95 = vadd.f32 %v89, %v93
    %v96 = vsub.f32 %v95, %v85
    %vm97 = vcmp.gt.f32.partialorder %v96, 0.0
    %v98 = vrcp.pop %v96
    %v99 = vmul.f32 %v85, %v98
    %v100 = vsel %vm97, %v99, 0.0
    %v101 = vlaneseq
    %v102 = vshrl.u32 %v101, 7
    %v103 = vstv %s24
    %vm104 = vcmp.lt.s32.totalorder %v102, %v103
    %v105 = vsel %vm104, %v100, -1.0
    %vm106 = vcmask 523264
    %v107 = vsel %vm106, %v105, -inf
    %v108 = vrot.slane %v107, 4
    %v109 = vmax.f32 %v107, %v108
    %v110 = vrot.slane %v109, 2
    %v111 = vmax.f32 %v109, %v110
    %v112 = vrot.slane %v111, 1
    %v113 = vmax.f32 %v111, %v112
    %vm114 = vcmp.gt.f32.partialorder %v113, 0.3
    %v115 = vsel %vm114, 1, 0
    %v116 = vcvt.s32.f32 %v115
    %vm117 = vcmp.eq.f32.partialorder %v105, %v113
    %v118 = vsel %vm117, %v102, 8
    %v119 = vsel %vm106, %v118, 2147483647
    %v120 = vrot.slane %v119, 4
    %vm121 = vcmp.lt.s32.totalorder %v119, %v120
    %v122 = vsel %vm121, %v119, %v120
    %v123 = vrot.slane %v122, 2
    %vm124 = vcmp.lt.s32.totalorder %v122, %v123
    %v125 = vsel %vm124, %v122, %v123
    %v126 = vrot.slane %v125, 1
    %vm127 = vcmp.lt.s32.totalorder %v125, %v126
    %v128 = vsel %vm127, %v125, %v126
    %vm129 = vcmp.eq.s32.totalorder %v102, %v128
    %v130 = vld [vmem:[%s3] sm:$0xff]
    %v131 = vsel %vm129, 1, 0
    %v132 = vcvt.s32.f32 %v131
    %vm133 = vcmask 64512
    %v135 = vsel %vm133, %v130, 0
    %137 = vmatprep.subr.mxu0 0.0
    %138 = vmatpush1.msra.mxu0 %v132
    %139 = vmatprep.subr.mxu0 0.0
    %140 = vmatpush1.msra.mxu0 0.0
    %141 = vmatprep.subr.mxu0 0.0
    %142 = vmatpush1.msra.mxu0 0.0
    %143 = vmatprep.subr.mxu0 0.0
    %144 = vmatpush1.msra.mxu0 0.0
    %145 = vmatprep.subr.mxu0 0.0
    %146 = vmatpush1.msra.mxu0 0.0
    %147 = vmatprep.subr.mxu0 0.0
    %148 = vmatpush1.msra.mxu0 0.0
    %149 = vmatprep.subr.mxu0 0.0
    %150 = vmatpush1.msra.mxu0 0.0
    %151 = vmatprep.subr.mxu0 0.0
    %152 = vmatpush1.msra.mxu0 0.0
    %153 = vmatprep.subr.mxu0 0.0
    %154 = vmatpush1.msra.mxu0 0.0
    %155 = vmatprep.subr.mxu0 0.0
    %156 = vmatpush1.msra.mxu0 0.0
    %157 = vmatprep.subr.mxu0 0.0
    %158 = vmatpush1.msra.mxu0 0.0
    %159 = vmatprep.subr.mxu0 0.0
    %160 = vmatpush1.msra.mxu0 0.0
    %161 = vmatprep.subr.mxu0 0.0
    %162 = vmatpush1.msra.mxu0 0.0
    %163 = vmatprep.subr.mxu0 0.0
    %164 = vmatpush1.msra.mxu0 0.0
    %165 = vmatprep.subr.mxu0 0.0
    %166 = vmatpush1.msra.mxu0 0.0
    %167 = vmatprep.subr.mxu0 0.0
    %168 = vmatpush1.msra.mxu0 0.0
    %169 = vmatprep.subr.mxu0 0.0
    %170 = vmatpush1.msra.mxu0 0.0
    %171 = vmatprep.subr.mxu0 0.0
    %172 = vmatpush1.msra.mxu0 0.0
    %173 = vmatprep.subr.mxu0 0.0
    %174 = vmatpush1.msra.mxu0 0.0
    %175 = vmatprep.subr.mxu0 0.0
    %176 = vmatpush1.msra.mxu0 0.0
    %177 = vmatprep.subr.mxu0 0.0
    %178 = vmatpush1.msra.mxu0 0.0
    %179 = vmatprep.subr.mxu0 0.0
    %180 = vmatpush1.msra.mxu0 0.0
    %181 = vmatprep.subr.mxu0 0.0
    %182 = vmatpush1.msra.mxu0 0.0
    %183 = vmatprep.subr.mxu0 0.0
    %184 = vmatpush1.msra.mxu0 0.0
    %185 = vmatprep.subr.mxu0 0.0
    %186 = vmatpush1.msra.mxu0 0.0
    %187 = vmatprep.subr.mxu0 0.0
    %188 = vmatpush1.msra.mxu0 0.0
    %189 = vmatprep.subr.mxu0 0.0
    %190 = vmatpush1.msra.mxu0 0.0
    %191 = vmatprep.subr.mxu0 0.0
    %192 = vmatpush1.msra.mxu0 0.0
    %193 = vmatprep.subr.mxu0 0.0
    %194 = vmatpush1.msra.mxu0 0.0
    %195 = vmatprep.subr.mxu0 0.0
    %196 = vmatpush1.msra.mxu0 0.0
    %197 = vmatprep.subr.mxu0 0.0
    %198 = vmatpush1.msra.mxu0 0.0
    %199 = vmatprep.subr.mxu0 0.0
    %200 = vmatpush1.msra.mxu0 0.0
    %201 = vmatprep.mubr.f32.mxu0 0.0
    %202 = vmatmul.mubr.f32.gmra.mrb[0].mxu0 %v135
    %v203 = vpop.f32.mrb[0].mxu0
    %v204 = vadd.f32 0.0, %v203
    %v205 = vpop.f32.mrb[0].mxu0
    %206 = vdwg.mxu0
    %v207 = vtanh.pop %v25
    %v208 = vadd.f32 %v207, 1.0
    %v209 = vmul.f32 %v208, 0.5
    %v210 = vmul.f32 %v116, %v209
    %v211 = vsub.f32 1.0, %v116
    %v212 = vsub.f32 1.0, %v209
    %v213 = vmul.f32 %v211, %v212
    %v214 = vadd.f32 %v210, %v213
    %v215 = vmax.f32 %v214, 1e-12
    %v216 = vlog2.pop %v215
    %v217 = vmul.f32 %v216, 0.6931472
    %v218 = vsub.f32 0.0, %v217
    %v219 = vsub.f32 1.0, %v214
    %v220 = vmul.f32 %v219, 0.25
    %v221 = vmul.f32 %v220, %v219
    %v222 = vmul.f32 %v221, %v218
    %v224 = vrot.slane %v222, 4
    %vm226 = vcmask 516096
    %v227 = vsel %vm226, %v224, 0.0
    %228 = vadd.xlane.f32.xlu0 %v227
    %v229 = vpop.xlane.xlu0 %228
    %v230 = vrot.slane %v229, 4
    %v231 = vadd.f32 %v229, %v230
    %v232 = vrot.slane %v231, 2
    %v233 = vadd.f32 %v231, %v232
    %v234 = vrot.slane %v233, 1
    %v235 = vadd.f32 %v233, %v234
    %s236 = vtos %v235
    %v237 = vstv %s236
    %v238 = vadd.f32 %v237, 0.0
    %v239 = vmax.f32 %v29, %v204
    %v241 = vrot.slane %v204, 2
    %v243 = vmin.f32 %v30, %v241
    %vm244 = vcmp.gt.f32.partialorder %v243, %v239
    %v245 = vsel %vm244, 1, 0
    %v246 = vrot.slane %v245, 1
    %vm247 = vcmp.ne.s32.totalorder %v246, 0
    %vm248 = vmand %vm244, %vm247
    %v249 = vsub.f32 %v243, %v239
    %v251 = vrot.slane %v249, 1
    %v253 = vmul.f32 %v249, %v251
    %v254 = vsel %vm248, %v253, 0.0
    %v255 = vrot.slane %v204, 6
    %v257 = vsub.f32 %v204, %v255
    %v259 = vrot.slane %v257, 1
    %v261 = vmul.f32 %v257, %v259
    %v262 = vadd.f32 %v34, %v261
    %v264 = vrot.slane %v254, 6
    %v266 = vsub.f32 %v262, %v264
    %v267 = vadd.f32 %v266, 1e-07
    %v269 = vrot.slane %v267, 2
    %v271 = vrcp.pop %v269
    %v272 = vmul.f32 %v254, %v271
    %v273 = vmin.f32 %v29, %v204
    %v274 = vmax.f32 %v30, %v241
    %v275 = vsub.f32 %v274, %v273
    %v276 = vmul.f32 %v275, %v275
    %v278 = vrot.slane %v276, 1
    %v280 = vadd.f32 %v276, %v278
    %v281 = vadd.f32 %v280, 1e-07
    %v282 = vadd.f32 %v29, %v30
    %v283 = vsub.f32 %v282, %v204
    %v284 = vsub.f32 %v283, %v241
    %v285 = vmul.f32 %v284, %v284
    %v287 = vrot.slane %v285, 1
    %v289 = vadd.f32 %v285, %v287
    %v290 = vmul.f32 %v289, 0.25
    %v291 = vsub.f32 1.0, %v272
    %v292 = vrcp.pop %v281
    %v293 = vmul.f32 %v290, %v292
    %v294 = vadd.f32 %v291, %v293
    %v295 = vsub.f32 %v204, %v32
    %v296 = vmul.f32 %v295, %v295
    %v297 = vmul.f32 %v296, 0.40528473
    %v299 = vrot.slane %v297, 4
    %v301 = vadd.f32 %v291, %v299
    %v302 = vadd.f32 %v301, 1e-07
    %v304 = vrot.slane %v302, 4
    %v306 = vrcp.pop %v304
    %v307 = vmul.f32 %v297, %v306
    %v308 = vmul.f32 %v307, %v297
    %v310 = vrot.slane %v308, 4
    %v312 = vadd.f32 %v294, %v310
    %v313 = vsel %vm226, %v116, 0.0
    %314 = vadd.xlane.f32.xlu0 %v313
    %v315 = vpop.xlane.xlu0 %314
    %v316 = vrot.slane %v315, 4
    %v317 = vadd.f32 %v315, %v316
    %v318 = vrot.slane %v317, 2
    %v319 = vadd.f32 %v317, %v318
    %v320 = vrot.slane %v319, 1
    %v321 = vadd.f32 %v319, %v320
    %s322 = vtos %v321
    %v323 = vstv %s322
    %v324 = vsel %vm114, %v312, 0.0
    %v325 = vsel %vm226, %v324, 0.0
    %326 = vadd.xlane.f32.xlu0 %v325
    %v327 = vpop.xlane.xlu0 %326
    %v328 = vrot.slane %v327, 4
    %v329 = vadd.f32 %v327, %v328
    %v330 = vrot.slane %v329, 2
    %v331 = vadd.f32 %v329, %v330
    %v332 = vrot.slane %v331, 1
    %v333 = vadd.f32 %v331, %v332
    %s334 = vtos %v333
    %v335 = vstv %s334
    %vm336 = vcmp.gt.f32.partialorder %v323, 0.0
    %v337 = vmax.f32 %v323, 1.0
    %v338 = vrcp.pop %v337
    %v339 = vmul.f32 %v335, %v338
    %v340 = vsel %vm336, %v339, 0.0
    %v341 = vadd.f32 %v340, 0.0
    %v342 = vsel %vm336, 1.0, 0.0
    %v343 = vadd.f32 %v342, 0.0
    %s344 = scalar_lea.vmem %s1, 8
    %v345 = vld [vmem:[%s344] sm:$0x3f]
    %s346 = scalar_lea.vmem %s2, 8
    %v347 = vld [vmem:[%s346] sm:$0xff]
    %s348 = sld [smem:[#allocation3 + $0x1]]
    %v349 = vmul.f32 %v345, 0.5
    %v351 = vrot.slane %v349, 2
    %v353 = vsub.f32 %v345, %v351
    %v354 = vadd.f32 %v345, %v351
    %v356 = vrot.slane %v345, 1
    %v358 = vmul.f32 %v345, %v356
    %360 = vrot.lane.b32.xlu0 %v347, 2
    %v361 = vpop.permute.xlu0 %360
    %v363 = vsub.f32 %v347, %v361
    %365 = vrot.lane.b32.xlu0 %v363, 127
    %v366 = vpop.permute.xlu0 %365
    %v368 = vmul.f32 %v363, %v366
    %v369 = vlaneseq
    %v370 = vshrl.u32 %v369, 7
    %v371 = vsub.s32 0, %v370
    %v372 = vrot.slane %v354, %v371
    %373 = vset.pattern.permute.xlu0 2
    %374 = vperm.xlu0 %373, %v347
    %v375 = vpop.permute.xlu0 %374
    %v377 = vmin.f32 %v372, %v375
    %v378 = vlaneseq
    %v379 = vshrl.u32 %v378, 7
    %v380 = vsub.s32 0, %v379
    %v381 = vrot.slane %v353, %v380
    %382 = vset.pattern.permute.xlu0 0
    %383 = vperm.xlu0 %382, %v347
    %v384 = vpop.permute.xlu0 %383
    %v386 = vmax.f32 %v381, %v384
    %v387 = vsub.f32 %v377, %v386
    %v388 = vmax.f32 %v387, 0.0
    %v389 = vlaneseq
    %v390 = vshrl.u32 %v389, 7
    %v391 = vsub.s32 1, %v390
    %v392 = vrot.slane %v354, %v391
    %393 = vset.pattern.permute.xlu0 3
    %394 = vperm.xlu0 %393, %v347
    %v395 = vpop.permute.xlu0 %394
    %v397 = vmin.f32 %v392, %v395
    %v398 = vlaneseq
    %v399 = vshrl.u32 %v398, 7
    %v400 = vsub.s32 1, %v399
    %v401 = vrot.slane %v353, %v400
    %402 = vset.pattern.permute.xlu0 1
    %403 = vperm.xlu0 %402, %v347
    %v404 = vpop.permute.xlu0 %403
    %v406 = vmax.f32 %v401, %v404
    %v407 = vsub.f32 %v397, %v406
    %v408 = vmax.f32 %v407, 0.0
    %v409 = vmul.f32 %v388, %v408
    %v410 = vlaneseq
    %v411 = vshrl.u32 %v410, 7
    %v412 = vsub.s32 2, %v411
    %v413 = vrot.slane %v358, %v412
    %415 = vset.pattern.permute.xlu0 2
    %416 = vperm.xlu0 %415, %v368
    %v417 = vpop.permute.xlu0 %416
    %v419 = vadd.f32 %v413, %v417
    %v420 = vsub.f32 %v419, %v409
    %vm421 = vcmp.gt.f32.partialorder %v420, 0.0
    %v422 = vrcp.pop %v420
    %v423 = vmul.f32 %v409, %v422
    %v424 = vsel %vm421, %v423, 0.0
    %v425 = vstv %s348
    %vm426 = vcmp.lt.s32.totalorder %v102, %v425
    %v427 = vsel %vm426, %v424, -1.0
    %v428 = vsel %vm106, %v427, -inf
    %v429 = vrot.slane %v428, 4
    %v430 = vmax.f32 %v428, %v429
    %v431 = vrot.slane %v430, 2
    %v432 = vmax.f32 %v430, %v431
    %v433 = vrot.slane %v432, 1
    %v434 = vmax.f32 %v432, %v433
    %vm435 = vcmp.gt.f32.partialorder %v434, 0.3
    %v436 = vsel %vm435, 1, 0
    %v437 = vcvt.s32.f32 %v436
    %vm438 = vcmp.eq.f32.partialorder %v427, %v434
    %v439 = vsel %vm438, %v102, 8
    %v440 = vsel %vm106, %v439, 2147483647
    %v441 = vrot.slane %v440, 4
    %vm442 = vcmp.lt.s32.totalorder %v440, %v441
    %v443 = vsel %vm442, %v440, %v441
    %v444 = vrot.slane %v443, 2
    %vm445 = vcmp.lt.s32.totalorder %v443, %v444
    %v446 = vsel %vm445, %v443, %v444
    %v447 = vrot.slane %v446, 1
    %vm448 = vcmp.lt.s32.totalorder %v446, %v447
    %v449 = vsel %vm448, %v446, %v447
    %vm450 = vcmp.eq.s32.totalorder %v102, %v449
    %s451 = scalar_lea.vmem %s3, 8
    %v452 = vld [vmem:[%s451] sm:$0xff]
    %v453 = vsel %vm450, 1, 0
    %v454 = vcvt.s32.f32 %v453
    %v456 = vsel %vm133, %v452, 0
    %458 = vmatprep.subr.mxu0 0.0
    %459 = vmatpush1.msra.mxu0 %v454
    %460 = vmatprep.subr.mxu0 0.0
    %461 = vmatpush1.msra.mxu0 0.0
    %462 = vmatprep.subr.mxu0 0.0
    %463 = vmatpush1.msra.mxu0 0.0
    %464 = vmatprep.subr.mxu0 0.0
    %465 = vmatpush1.msra.mxu0 0.0
    %466 = vmatprep.subr.mxu0 0.0
    %467 = vmatpush1.msra.mxu0 0.0
    %468 = vmatprep.subr.mxu0 0.0
    %469 = vmatpush1.msra.mxu0 0.0
    %470 = vmatprep.subr.mxu0 0.0
    %471 = vmatpush1.msra.mxu0 0.0
    %472 = vmatprep.subr.mxu0 0.0
    %473 = vmatpush1.msra.mxu0 0.0
    %474 = vmatprep.subr.mxu0 0.0
    %475 = vmatpush1.msra.mxu0 0.0
    %476 = vmatprep.subr.mxu0 0.0
    %477 = vmatpush1.msra.mxu0 0.0
    %478 = vmatprep.subr.mxu0 0.0
    %479 = vmatpush1.msra.mxu0 0.0
    %480 = vmatprep.subr.mxu0 0.0
    %481 = vmatpush1.msra.mxu0 0.0
    %482 = vmatprep.subr.mxu0 0.0
    %483 = vmatpush1.msra.mxu0 0.0
    %484 = vmatprep.subr.mxu0 0.0
    %485 = vmatpush1.msra.mxu0 0.0
    %486 = vmatprep.subr.mxu0 0.0
    %487 = vmatpush1.msra.mxu0 0.0
    %488 = vmatprep.subr.mxu0 0.0
    %489 = vmatpush1.msra.mxu0 0.0
    %490 = vmatprep.subr.mxu0 0.0
    %491 = vmatpush1.msra.mxu0 0.0
    %492 = vmatprep.subr.mxu0 0.0
    %493 = vmatpush1.msra.mxu0 0.0
    %494 = vmatprep.subr.mxu0 0.0
    %495 = vmatpush1.msra.mxu0 0.0
    %496 = vmatprep.subr.mxu0 0.0
    %497 = vmatpush1.msra.mxu0 0.0
    %498 = vmatprep.subr.mxu0 0.0
    %499 = vmatpush1.msra.mxu0 0.0
    %500 = vmatprep.subr.mxu0 0.0
    %501 = vmatpush1.msra.mxu0 0.0
    %502 = vmatprep.subr.mxu0 0.0
    %503 = vmatpush1.msra.mxu0 0.0
    %504 = vmatprep.subr.mxu0 0.0
    %505 = vmatpush1.msra.mxu0 0.0
    %506 = vmatprep.subr.mxu0 0.0
    %507 = vmatpush1.msra.mxu0 0.0
    %508 = vmatprep.subr.mxu0 0.0
    %509 = vmatpush1.msra.mxu0 0.0
    %510 = vmatprep.subr.mxu0 0.0
    %511 = vmatpush1.msra.mxu0 0.0
    %512 = vmatprep.subr.mxu0 0.0
    %513 = vmatpush1.msra.mxu0 0.0
    %514 = vmatprep.subr.mxu0 0.0
    %515 = vmatpush1.msra.mxu0 0.0
    %516 = vmatprep.subr.mxu0 0.0
    %517 = vmatpush1.msra.mxu0 0.0
    %518 = vmatprep.subr.mxu0 0.0
    %519 = vmatpush1.msra.mxu0 0.0
    %520 = vmatprep.subr.mxu0 0.0
    %521 = vmatpush1.msra.mxu0 0.0
    %522 = vmatprep.mubr.f32.mxu0 0.0
    %523 = vmatmul.mubr.f32.gmra.mrb[0].mxu0 %v456
    %v524 = vpop.f32.mrb[0].mxu0
    %v525 = vadd.f32 0.0, %v524
    %v526 = vpop.f32.mrb[0].mxu0
    %527 = vdwg.mxu0
    %v528 = vtanh.pop %v349
    %v529 = vadd.f32 %v528, 1.0
    %v530 = vmul.f32 %v529, 0.5
    %v531 = vmul.f32 %v437, %v530
    %v532 = vsub.f32 1.0, %v437
    %v533 = vsub.f32 1.0, %v530
    %v534 = vmul.f32 %v532, %v533
    %v535 = vadd.f32 %v531, %v534
    %v536 = vmax.f32 %v535, 1e-12
    %v537 = vlog2.pop %v536
    %v538 = vmul.f32 %v537, 0.6931472
    %v539 = vsub.f32 0.0, %v538
    %v540 = vsub.f32 1.0, %v535
    %v541 = vmul.f32 %v540, 0.25
    %v542 = vmul.f32 %v541, %v540
    %v543 = vmul.f32 %v542, %v539
    %v545 = vrot.slane %v543, 4
    %v547 = vsel %vm226, %v545, 0.0
    %548 = vadd.xlane.f32.xlu0 %v547
    %v549 = vpop.xlane.xlu0 %548
    %v550 = vrot.slane %v549, 4
    %v551 = vadd.f32 %v549, %v550
    %v552 = vrot.slane %v551, 2
    %v553 = vadd.f32 %v551, %v552
    %v554 = vrot.slane %v553, 1
    %v555 = vadd.f32 %v553, %v554
    %s556 = vtos %v555
    %v557 = vstv %s556
    %v558 = vadd.f32 %v238, %v557
    %v559 = vmax.f32 %v353, %v525
    %v561 = vrot.slane %v525, 2
    %v563 = vmin.f32 %v354, %v561
    %vm564 = vcmp.gt.f32.partialorder %v563, %v559
    %v565 = vsel %vm564, 1, 0
    %v566 = vrot.slane %v565, 1
    %vm567 = vcmp.ne.s32.totalorder %v566, 0
    %vm568 = vmand %vm564, %vm567
    %v569 = vsub.f32 %v563, %v559
    %v571 = vrot.slane %v569, 1
    %v573 = vmul.f32 %v569, %v571
    %v574 = vsel %vm568, %v573, 0.0
    %v575 = vrot.slane %v525, 6
    %v577 = vsub.f32 %v525, %v575
    %v579 = vrot.slane %v577, 1
    %v581 = vmul.f32 %v577, %v579
    %v582 = vadd.f32 %v358, %v581
    %v584 = vrot.slane %v574, 6
    %v586 = vsub.f32 %v582, %v584
    %v587 = vadd.f32 %v586, 1e-07
    %v589 = vrot.slane %v587, 2
    %v591 = vrcp.pop %v589
    %v592 = vmul.f32 %v574, %v591
    %v593 = vmin.f32 %v353, %v525
    %v594 = vmax.f32 %v354, %v561
    %v595 = vsub.f32 %v594, %v593
    %v596 = vmul.f32 %v595, %v595
    %v598 = vrot.slane %v596, 1
    %v600 = vadd.f32 %v596, %v598
    %v601 = vadd.f32 %v600, 1e-07
    %v602 = vadd.f32 %v353, %v354
    %v603 = vsub.f32 %v602, %v525
    %v604 = vsub.f32 %v603, %v561
    %v605 = vmul.f32 %v604, %v604
    %v607 = vrot.slane %v605, 1
    %v609 = vadd.f32 %v605, %v607
    %v610 = vmul.f32 %v609, 0.25
    %v611 = vsub.f32 1.0, %v592
    %v612 = vrcp.pop %v601
    %v613 = vmul.f32 %v610, %v612
    %v614 = vadd.f32 %v611, %v613
    %v615 = vsub.f32 %v525, %v356
    %v616 = vmul.f32 %v615, %v615
    %v617 = vmul.f32 %v616, 0.40528473
    %v619 = vrot.slane %v617, 4
    %v621 = vadd.f32 %v611, %v619
    %v622 = vadd.f32 %v621, 1e-07
    %v624 = vrot.slane %v622, 4
    %v626 = vrcp.pop %v624
    %v627 = vmul.f32 %v617, %v626
    %v628 = vmul.f32 %v627, %v617
    %v630 = vrot.slane %v628, 4
    %v632 = vadd.f32 %v614, %v630
    %v633 = vsel %vm226, %v437, 0.0
    %634 = vadd.xlane.f32.xlu0 %v633
    %v635 = vpop.xlane.xlu0 %634
    %v636 = vrot.slane %v635, 4
    %v637 = vadd.f32 %v635, %v636
    %v638 = vrot.slane %v637, 2
    %v639 = vadd.f32 %v637, %v638
    %v640 = vrot.slane %v639, 1
    %v641 = vadd.f32 %v639, %v640
    %s642 = vtos %v641
    %v643 = vstv %s642
    %v644 = vsel %vm435, %v632, 0.0
    %v645 = vsel %vm226, %v644, 0.0
    %646 = vadd.xlane.f32.xlu0 %v645
    %v647 = vpop.xlane.xlu0 %646
    %v648 = vrot.slane %v647, 4
    %v649 = vadd.f32 %v647, %v648
    %v650 = vrot.slane %v649, 2
    %v651 = vadd.f32 %v649, %v650
    %v652 = vrot.slane %v651, 1
    %v653 = vadd.f32 %v651, %v652
    %s654 = vtos %v653
    %v655 = vstv %s654
    %vm656 = vcmp.gt.f32.partialorder %v643, 0.0
    %v657 = vmax.f32 %v643, 1.0
    %v658 = vrcp.pop %v657
    %v659 = vmul.f32 %v655, %v658
    %v660 = vsel %vm656, %v659, 0.0
    %v661 = vadd.f32 %v341, %v660
    %v662 = vsel %vm656, 1.0, 0.0
    %v663 = vadd.f32 %v343, %v662
    %v664 = vrcp.pop 128.0
    %v665 = vmul.f32 %v558, %v664
    %vm666 = vcmp.gt.f32.partialorder %v663, 0.0
    %v667 = vmax.f32 %v663, 1.0
    %v668 = vrcp.pop %v667
    %v669 = vmul.f32 %v661, %v668
    %v670 = vsel %vm666, %v669, 0.0
    %v671 = vmul.f32 %v665, 3.0
    %v672 = vmul.f32 %v670, 7.5
    %v673 = vadd.f32 %v671, %v672
    %vm674 = vcmask 0
    %675 = vst.msk [vmem:[#allocation4] sm:$0x1] %vm674, %v673
    // Predicated region
    $region14: #{tpu_custom_call.1} parent=1 // pred_check
      _
    $region15: #{tpu_custom_call.1} parent=1 // pred_check_branch
      %677 = sbr.rel (0) target = $region17
    $region16: #{tpu_custom_call.1} parent=1 // pred_region
      %s679 = ssub.s32 16, 16
      %680 = vsyncadd [#allocation5], %s679
      %s682 = sshll.u32 [#allocation4], 4
      %s683 = int_to_ptr.vmem [resolvable:$true] %s682
      %685 = dma.vmem_to_hbm [thread:$0]  %s683, 16, %s4, [#allocation5]
    $region17: #{tpu_custom_call.1} parent=1 // pred_fallthru
      _
    // Predicated region
    $region18: #{tpu_custom_call.1} parent=1 // pred_check
      _
    $region19: #{tpu_custom_call.1} parent=1 // pred_check_branch
      %687 = sbr.rel (0) target = $region21
    $region20: #{tpu_custom_call.1} parent=1 // pred_region
      %688 = dma.done [#allocation5], 16
    $region21: #{tpu_custom_call.1} parent=1 // pred_fallthru
      _
    %689 = vsyncpa [#allocation5], 1

// kernel: tpu_custom_call.1
$region0: #{tpu_custom_call.1}
  #allocation0 [shape = 'u32[]', space=smem, size = 0x4, offset = 0x4, fixed_abs, tag = 'smem constant byte address 0x4 - core index']
  #allocation1 [shape = 'u32[144,128]{1,0:T(1,128)}', space=vmem, size = 0x12000, scoped, tag = 'internal scratch']
  #allocation2 [shape = 's32[1]{0}', space=sflag, size = 0x4, scoped, tag = 'scoped memory for tpu_custom_call.1']
  #allocation3 [shape = 'u8[512]{0}', space=smem, size = 0x200, scoped, tag = 'prefetched SMEM operand 0']
  %s0 = inlined_call_operand.vmem [shape: s32[2], index: 0, kind: input, shape index: {}]
  %s1 = inlined_call_operand.vmem [shape: f32[2,6,64], index: 1, kind: input, shape index: {}]
  %s2 = inlined_call_operand.vmem [shape: f32[2,8,5], index: 2, kind: input, shape index: {}]
  %s3 = inlined_call_operand.vmem [shape: f32[2,8,8], index: 3, kind: input, shape index: {}]
  %s4 = inlined_call_operand.hbm [shape: f32[1,1], index: 4, kind: output, shape index: {}]
  %s5 = sld [smem:[#allocation0]]
  $region22: #{tpu_custom_call.1} parent=0
    _
  %s7 = ssub.s32 1, %s5
  %s8 = scalar_select 0, %s7, %s5
  %s9 = sshll.u32 %s0, 4
  %s10 = int_to_ptr.vmem [resolvable:$true] %s9
  %12 = dma.vmem_to_smem %s10, 16, [#allocation3], [#allocation2]
  %13 = dma.done [#allocation2], 16
  %14 = sfence
  $region1: #{tpu_custom_call.1} parent=0
    #allocation4 [shape = 'u8[512]{0}', space=vmem, size = 0x400, scoped, tag = 'output window, operand 0, single buffered']
    #allocation5 [shape = 's32[1]{0}', space=sflag, size = 0x4, scoped, tag = 'scoped memory for tpu_custom_call.1']
    %15 = vsyncpa [#allocation5], 0
    // Predicated region
    $region2: #{tpu_custom_call.1} parent=1 // pred_check
      _
    $region3: #{tpu_custom_call.1} parent=1 // pred_check_branch
      %17 = sbr.rel (0) target = $region5
    $region4: #{tpu_custom_call.1} parent=1 // pred_region
      _
    $region5: #{tpu_custom_call.1} parent=1 // pred_fallthru
      _
    // Predicated region
    $region6: #{tpu_custom_call.1} parent=1 // pred_check
      _
    $region7: #{tpu_custom_call.1} parent=1 // pred_check_branch
      %19 = sbr.rel (0) target = $region9
    $region8: #{tpu_custom_call.1} parent=1 // pred_region
      _
    $region9: #{tpu_custom_call.1} parent=1 // pred_fallthru
      _
    // Predicated region
    $region10: #{tpu_custom_call.1} parent=1 // pred_check
      _
    $region11: #{tpu_custom_call.1} parent=1 // pred_check_branch
      %21 = sbr.rel (0) target = $region13
    $region12: #{tpu_custom_call.1} parent=1 // pred_region
      _
    $region13: #{tpu_custom_call.1} parent=1 // pred_fallthru
      _
    %v22 = vld [vmem:[%s1] sm:$0x3f]
    %v23 = vld [vmem:[%s2] sm:$0xff]
    %s24 = sld [smem:[#allocation3]]
    %v25 = vmul.f32 %v22, 0.5
    %v27 = vrot.slane %v25, 2
    %v29 = vsub.f32 %v22, %v27
    %v30 = vadd.f32 %v22, %v27
    %v32 = vrot.slane %v22, 1
    %v34 = vmul.f32 %v22, %v32
    %36 = vrot.lane.b32.xlu0 %v23, 2
    %v37 = vpop.permute.xlu0 %36
    %v39 = vsub.f32 %v23, %v37
    %41 = vrot.lane.b32.xlu0 %v39, 127
    %v42 = vpop.permute.xlu0 %41
    %v44 = vmul.f32 %v39, %v42
    %v45 = vlaneseq
    %v46 = vshrl.u32 %v45, 7
    %v47 = vsub.s32 0, %v46
    %v48 = vrot.slane %v30, %v47
    %49 = vset.pattern.permute.xlu0 2
    %50 = vperm.xlu0 %49, %v23
    %v51 = vpop.permute.xlu0 %50
    %v53 = vmin.f32 %v48, %v51
    %v54 = vlaneseq
    %v55 = vshrl.u32 %v54, 7
    %v56 = vsub.s32 0, %v55
    %v57 = vrot.slane %v29, %v56
    %58 = vset.pattern.permute.xlu0 0
    %59 = vperm.xlu0 %58, %v23
    %v60 = vpop.permute.xlu0 %59
    %v62 = vmax.f32 %v57, %v60
    %v63 = vsub.f32 %v53, %v62
    %v64 = vmax.f32 %v63, 0.0
    %v65 = vlaneseq
    %v66 = vshrl.u32 %v65, 7
    %v67 = vsub.s32 1, %v66
    %v68 = vrot.slane %v30, %v67
    %69 = vset.pattern.permute.xlu0 3
    %70 = vperm.xlu0 %69, %v23
    %v71 = vpop.permute.xlu0 %70
    %v73 = vmin.f32 %v68, %v71
    %v74 = vlaneseq
    %v75 = vshrl.u32 %v74, 7
    %v76 = vsub.s32 1, %v75
    %v77 = vrot.slane %v29, %v76
    %78 = vset.pattern.permute.xlu0 1
    %79 = vperm.xlu0 %78, %v23
    %v80 = vpop.permute.xlu0 %79
    %v82 = vmax.f32 %v77, %v80
    %v83 = vsub.f32 %v73, %v82
    %v84 = vmax.f32 %v83, 0.0
    %v85 = vmul.f32 %v64, %v84
    %v86 = vlaneseq
    %v87 = vshrl.u32 %v86, 7
    %v88 = vsub.s32 2, %v87
    %v89 = vrot.slane %v34, %v88
    %91 = vset.pattern.permute.xlu0 2
    %92 = vperm.xlu0 %91, %v44
    %v93 = vpop.permute.xlu0 %92
    %v95 = vadd.f32 %v89, %v93
    %v96 = vsub.f32 %v95, %v85
    %vm97 = vcmp.gt.f32.partialorder %v96, 0.0
    %v98 = vrcp.pop %v96
    %v99 = vmul.f32 %v85, %v98
    %v100 = vsel %vm97, %v99, 0.0
    %v101 = vlaneseq
    %v102 = vshrl.u32 %v101, 7
    %v103 = vstv %s24
    %vm104 = vcmp.lt.s32.totalorder %v102, %v103
    %v105 = vsel %vm104, %v100, -1.0
    %vm106 = vcmask 523264
    %v107 = vsel %vm106, %v105, -inf
    %v108 = vrot.slane %v107, 4
    %v109 = vmax.f32 %v107, %v108
    %v110 = vrot.slane %v109, 2
    %v111 = vmax.f32 %v109, %v110
    %v112 = vrot.slane %v111, 1
    %v113 = vmax.f32 %v111, %v112
    %vm114 = vcmp.gt.f32.partialorder %v113, 0.3
    %v115 = vsel %vm114, 1, 0
    %v116 = vcvt.s32.f32 %v115
    %vm117 = vcmp.eq.f32.partialorder %v105, %v113
    %v118 = vsel %vm117, %v102, 8
    %v119 = vsel %vm106, %v118, 2147483647
    %v120 = vrot.slane %v119, 4
    %vm121 = vcmp.lt.s32.totalorder %v119, %v120
    %v122 = vsel %vm121, %v119, %v120
    %v123 = vrot.slane %v122, 2
    %vm124 = vcmp.lt.s32.totalorder %v122, %v123
    %v125 = vsel %vm124, %v122, %v123
    %v126 = vrot.slane %v125, 1
    %vm127 = vcmp.lt.s32.totalorder %v125, %v126
    %v128 = vsel %vm127, %v125, %v126
    %vm129 = vcmp.eq.s32.totalorder %v102, %v128
    %v130 = vsel %vm129, %v60, 0.0
    %v131 = vsel %vm106, %v130, 0.0
    %v132 = vrot.slane %v131, 4
    %v133 = vadd.f32 %v131, %v132
    %v134 = vrot.slane %v133, 2
    %v135 = vadd.f32 %v133, %v134
    %v136 = vrot.slane %v135, 1
    %v137 = vadd.f32 %v135, %v136
    %v138 = vsel %vm129, %v80, 0.0
    %v139 = vsel %vm106, %v138, 0.0
    %v140 = vrot.slane %v139, 4
    %v141 = vadd.f32 %v139, %v140
    %v142 = vrot.slane %v141, 2
    %v143 = vadd.f32 %v141, %v142
    %v144 = vrot.slane %v143, 1
    %v145 = vadd.f32 %v143, %v144
    %v146 = vsel %vm129, %v51, 0.0
    %v147 = vsel %vm106, %v146, 0.0
    %v148 = vrot.slane %v147, 4
    %v149 = vadd.f32 %v147, %v148
    %v150 = vrot.slane %v149, 2
    %v151 = vadd.f32 %v149, %v150
    %v152 = vrot.slane %v151, 1
    %v153 = vadd.f32 %v151, %v152
    %v154 = vsel %vm129, %v71, 0.0
    %v155 = vsel %vm106, %v154, 0.0
    %v156 = vrot.slane %v155, 4
    %v157 = vadd.f32 %v155, %v156
    %v158 = vrot.slane %v157, 2
    %v159 = vadd.f32 %v157, %v158
    %v160 = vrot.slane %v159, 1
    %v161 = vadd.f32 %v159, %v160
    %162 = vset.pattern.permute.xlu0 4
    %163 = vperm.xlu0 %162, %v23
    %v164 = vpop.permute.xlu0 %163
    %v166 = vsel %vm129, %v164, 0.0
    %v167 = vsel %vm106, %v166, 0.0
    %v168 = vrot.slane %v167, 4
    %v169 = vadd.f32 %v167, %v168
    %v170 = vrot.slane %v169, 2
    %v171 = vadd.f32 %v169, %v170
    %v172 = vrot.slane %v171, 1
    %v173 = vadd.f32 %v171, %v172
    %v174 = vtanh.pop %v25
    %v175 = vadd.f32 %v174, 1.0
    %v176 = vmul.f32 %v175, 0.5
    %v177 = vmul.f32 %v116, %v176
    %v178 = vsub.f32 1.0, %v116
    %v179 = vsub.f32 1.0, %v176
    %v180 = vmul.f32 %v178, %v179
    %v181 = vadd.f32 %v177, %v180
    %v182 = vmax.f32 %v181, 1e-12
    %v183 = vlog2.pop %v182
    %v184 = vmul.f32 %v183, 0.6931472
    %v185 = vsub.f32 0.0, %v184
    %v186 = vsub.f32 1.0, %v181
    %v187 = vmul.f32 %v186, 0.25
    %v188 = vmul.f32 %v187, %v186
    %v189 = vmul.f32 %v188, %v185
    %v191 = vrot.slane %v189, 4
    %vm193 = vcmask 516096
    %v194 = vsel %vm193, %v191, 0.0
    %195 = vadd.xlane.f32.xlu0 %v194
    %v196 = vpop.xlane.xlu0 %195
    %v197 = vrot.slane %v196, 4
    %v198 = vadd.f32 %v196, %v197
    %v199 = vrot.slane %v198, 2
    %v200 = vadd.f32 %v198, %v199
    %v201 = vrot.slane %v200, 1
    %v202 = vadd.f32 %v200, %v201
    %s203 = vtos %v202
    %v204 = vstv %s203
    %v205 = vadd.f32 %v204, 0.0
    %v206 = vmax.f32 %v29, %v137
    %v207 = vmax.f32 %v29, %v145
    %v208 = vmin.f32 %v30, %v153
    %v209 = vmin.f32 %v30, %v161
    %vm210 = vcmp.gt.f32.partialorder %v208, %v206
    %vm211 = vcmp.gt.f32.partialorder %v209, %v207
    %v212 = vsel %vm211, 1, 0
    %v213 = vrot.slane %v212, 1
    %vm214 = vcmp.ne.s32.totalorder %v213, 0
    %vm215 = vmand %vm210, %vm214
    %v216 = vsub.f32 %v208, %v206
    %v217 = vsub.f32 %v209, %v207
    %v219 = vrot.slane %v217, 1
    %v221 = vmul.f32 %v216, %v219
    %v222 = vsel %vm215, %v221, 0.0
    %v223 = vsub.f32 %v153, %v137
    %v224 = vsub.f32 %v161, %v145
    %v225 = vmul.f32 %v223, %v224
    %v226 = vadd.f32 %v34, %v225
    %v228 = vrot.slane %v222, 6
    %v230 = vsub.f32 %v226, %v228
    %v231 = vadd.f32 %v230, 1e-07
    %v233 = vrot.slane %v231, 2
    %v235 = vrcp.pop %v233
    %v236 = vmul.f32 %v222, %v235
    %v237 = vmin.f32 %v29, %v137
    %v238 = vmin.f32 %v29, %v145
    %v239 = vmax.f32 %v30, %v153
    %v240 = vmax.f32 %v30, %v161
    %v241 = vsub.f32 %v239, %v237
    %v242 = vmul.f32 %v241, %v241
    %v243 = vsub.f32 %v240, %v238
    %v244 = vmul.f32 %v243, %v243
    %v246 = vrot.slane %v244, 1
    %v248 = vadd.f32 %v242, %v246
    %v249 = vadd.f32 %v248, 1e-07
    %v250 = vadd.f32 %v29, %v30
    %v251 = vsub.f32 %v250, %v137
    %v252 = vsub.f32 %v251, %v153
    %v253 = vmul.f32 %v252, %v252
    %v254 = vsub.f32 %v250, %v145
    %v255 = vsub.f32 %v254, %v161
    %v256 = vmul.f32 %v255, %v255
    %v258 = vrot.slane %v256, 1
    %v260 = vadd.f32 %v253, %v258
    %v261 = vmul.f32 %v260, 0.25
    %v262 = vsub.f32 1.0, %v236
    %v263 = vrcp.pop %v249
    %v264 = vmul.f32 %v261, %v263
    %v265 = vadd.f32 %v262, %v264
    %v266 = vsub.f32 %v173, %v22
    %v267 = vmul.f32 %v266, %v266
    %v268 = vmul.f32 %v267, 0.40528473
    %v270 = vrot.slane %v268, 5
    %v272 = vadd.f32 %v262, %v270
    %v273 = vadd.f32 %v272, 1e-07
    %v275 = vrot.slane %v273, 3
    %v277 = vrcp.pop %v275
    %v278 = vmul.f32 %v268, %v277
    %v279 = vmul.f32 %v278, %v268
    %v281 = vrot.slane %v279, 5
    %v283 = vadd.f32 %v265, %v281
    %v284 = vsel %vm193, %v116, 0.0
    %285 = vadd.xlane.f32.xlu0 %v284
    %v286 = vpop.xlane.xlu0 %285
    %v287 = vrot.slane %v286, 4
    %v288 = vadd.f32 %v286, %v287
    %v289 = vrot.slane %v288, 2
    %v290 = vadd.f32 %v288, %v289
    %v291 = vrot.slane %v290, 1
    %v292 = vadd.f32 %v290, %v291
    %s293 = vtos %v292
    %v294 = vstv %s293
    %v295 = vsel %vm114, %v283, 0.0
    %v296 = vsel %vm193, %v295, 0.0
    %297 = vadd.xlane.f32.xlu0 %v296
    %v298 = vpop.xlane.xlu0 %297
    %v299 = vrot.slane %v298, 4
    %v300 = vadd.f32 %v298, %v299
    %v301 = vrot.slane %v300, 2
    %v302 = vadd.f32 %v300, %v301
    %v303 = vrot.slane %v302, 1
    %v304 = vadd.f32 %v302, %v303
    %s305 = vtos %v304
    %v306 = vstv %s305
    %vm307 = vcmp.gt.f32.partialorder %v294, 0.0
    %v308 = vmax.f32 %v294, 1.0
    %v309 = vrcp.pop %v308
    %v310 = vmul.f32 %v306, %v309
    %v311 = vsel %vm307, %v310, 0.0
    %v312 = vadd.f32 %v311, 0.0
    %v313 = vsel %vm307, 1.0, 0.0
    %v314 = vadd.f32 %v313, 0.0
    %s315 = scalar_lea.vmem %s1, 8
    %v316 = vld [vmem:[%s315] sm:$0x3f]
    %s317 = scalar_lea.vmem %s2, 8
    %v318 = vld [vmem:[%s317] sm:$0xff]
    %s319 = sld [smem:[#allocation3 + $0x1]]
    %v320 = vmul.f32 %v316, 0.5
    %v322 = vrot.slane %v320, 2
    %v324 = vsub.f32 %v316, %v322
    %v325 = vadd.f32 %v316, %v322
    %v327 = vrot.slane %v316, 1
    %v329 = vmul.f32 %v316, %v327
    %331 = vrot.lane.b32.xlu0 %v318, 2
    %v332 = vpop.permute.xlu0 %331
    %v334 = vsub.f32 %v318, %v332
    %336 = vrot.lane.b32.xlu0 %v334, 127
    %v337 = vpop.permute.xlu0 %336
    %v339 = vmul.f32 %v334, %v337
    %v340 = vlaneseq
    %v341 = vshrl.u32 %v340, 7
    %v342 = vsub.s32 0, %v341
    %v343 = vrot.slane %v325, %v342
    %344 = vset.pattern.permute.xlu0 2
    %345 = vperm.xlu0 %344, %v318
    %v346 = vpop.permute.xlu0 %345
    %v348 = vmin.f32 %v343, %v346
    %v349 = vlaneseq
    %v350 = vshrl.u32 %v349, 7
    %v351 = vsub.s32 0, %v350
    %v352 = vrot.slane %v324, %v351
    %353 = vset.pattern.permute.xlu0 0
    %354 = vperm.xlu0 %353, %v318
    %v355 = vpop.permute.xlu0 %354
    %v357 = vmax.f32 %v352, %v355
    %v358 = vsub.f32 %v348, %v357
    %v359 = vmax.f32 %v358, 0.0
    %v360 = vlaneseq
    %v361 = vshrl.u32 %v360, 7
    %v362 = vsub.s32 1, %v361
    %v363 = vrot.slane %v325, %v362
    %364 = vset.pattern.permute.xlu0 3
    %365 = vperm.xlu0 %364, %v318
    %v366 = vpop.permute.xlu0 %365
    %v368 = vmin.f32 %v363, %v366
    %v369 = vlaneseq
    %v370 = vshrl.u32 %v369, 7
    %v371 = vsub.s32 1, %v370
    %v372 = vrot.slane %v324, %v371
    %373 = vset.pattern.permute.xlu0 1
    %374 = vperm.xlu0 %373, %v318
    %v375 = vpop.permute.xlu0 %374
    %v377 = vmax.f32 %v372, %v375
    %v378 = vsub.f32 %v368, %v377
    %v379 = vmax.f32 %v378, 0.0
    %v380 = vmul.f32 %v359, %v379
    %v381 = vlaneseq
    %v382 = vshrl.u32 %v381, 7
    %v383 = vsub.s32 2, %v382
    %v384 = vrot.slane %v329, %v383
    %386 = vset.pattern.permute.xlu0 2
    %387 = vperm.xlu0 %386, %v339
    %v388 = vpop.permute.xlu0 %387
    %v390 = vadd.f32 %v384, %v388
    %v391 = vsub.f32 %v390, %v380
    %vm392 = vcmp.gt.f32.partialorder %v391, 0.0
    %v393 = vrcp.pop %v391
    %v394 = vmul.f32 %v380, %v393
    %v395 = vsel %vm392, %v394, 0.0
    %v396 = vstv %s319
    %vm397 = vcmp.lt.s32.totalorder %v102, %v396
    %v398 = vsel %vm397, %v395, -1.0
    %v399 = vsel %vm106, %v398, -inf
    %v400 = vrot.slane %v399, 4
    %v401 = vmax.f32 %v399, %v400
    %v402 = vrot.slane %v401, 2
    %v403 = vmax.f32 %v401, %v402
    %v404 = vrot.slane %v403, 1
    %v405 = vmax.f32 %v403, %v404
    %vm406 = vcmp.gt.f32.partialorder %v405, 0.3
    %v407 = vsel %vm406, 1, 0
    %v408 = vcvt.s32.f32 %v407
    %vm409 = vcmp.eq.f32.partialorder %v398, %v405
    %v410 = vsel %vm409, %v102, 8
    %v411 = vsel %vm106, %v410, 2147483647
    %v412 = vrot.slane %v411, 4
    %vm413 = vcmp.lt.s32.totalorder %v411, %v412
    %v414 = vsel %vm413, %v411, %v412
    %v415 = vrot.slane %v414, 2
    %vm416 = vcmp.lt.s32.totalorder %v414, %v415
    %v417 = vsel %vm416, %v414, %v415
    %v418 = vrot.slane %v417, 1
    %vm419 = vcmp.lt.s32.totalorder %v417, %v418
    %v420 = vsel %vm419, %v417, %v418
    %vm421 = vcmp.eq.s32.totalorder %v102, %v420
    %v422 = vsel %vm421, %v355, 0.0
    %v423 = vsel %vm106, %v422, 0.0
    %v424 = vrot.slane %v423, 4
    %v425 = vadd.f32 %v423, %v424
    %v426 = vrot.slane %v425, 2
    %v427 = vadd.f32 %v425, %v426
    %v428 = vrot.slane %v427, 1
    %v429 = vadd.f32 %v427, %v428
    %v430 = vsel %vm421, %v375, 0.0
    %v431 = vsel %vm106, %v430, 0.0
    %v432 = vrot.slane %v431, 4
    %v433 = vadd.f32 %v431, %v432
    %v434 = vrot.slane %v433, 2
    %v435 = vadd.f32 %v433, %v434
    %v436 = vrot.slane %v435, 1
    %v437 = vadd.f32 %v435, %v436
    %v438 = vsel %vm421, %v346, 0.0
    %v439 = vsel %vm106, %v438, 0.0
    %v440 = vrot.slane %v439, 4
    %v441 = vadd.f32 %v439, %v440
    %v442 = vrot.slane %v441, 2
    %v443 = vadd.f32 %v441, %v442
    %v444 = vrot.slane %v443, 1
    %v445 = vadd.f32 %v443, %v444
    %v446 = vsel %vm421, %v366, 0.0
    %v447 = vsel %vm106, %v446, 0.0
    %v448 = vrot.slane %v447, 4
    %v449 = vadd.f32 %v447, %v448
    %v450 = vrot.slane %v449, 2
    %v451 = vadd.f32 %v449, %v450
    %v452 = vrot.slane %v451, 1
    %v453 = vadd.f32 %v451, %v452
    %454 = vset.pattern.permute.xlu0 4
    %455 = vperm.xlu0 %454, %v318
    %v456 = vpop.permute.xlu0 %455
    %v458 = vsel %vm421, %v456, 0.0
    %v459 = vsel %vm106, %v458, 0.0
    %v460 = vrot.slane %v459, 4
    %v461 = vadd.f32 %v459, %v460
    %v462 = vrot.slane %v461, 2
    %v463 = vadd.f32 %v461, %v462
    %v464 = vrot.slane %v463, 1
    %v465 = vadd.f32 %v463, %v464
    %v466 = vtanh.pop %v320
    %v467 = vadd.f32 %v466, 1.0
    %v468 = vmul.f32 %v467, 0.5
    %v469 = vmul.f32 %v408, %v468
    %v470 = vsub.f32 1.0, %v408
    %v471 = vsub.f32 1.0, %v468
    %v472 = vmul.f32 %v470, %v471
    %v473 = vadd.f32 %v469, %v472
    %v474 = vmax.f32 %v473, 1e-12
    %v475 = vlog2.pop %v474
    %v476 = vmul.f32 %v475, 0.6931472
    %v477 = vsub.f32 0.0, %v476
    %v478 = vsub.f32 1.0, %v473
    %v479 = vmul.f32 %v478, 0.25
    %v480 = vmul.f32 %v479, %v478
    %v481 = vmul.f32 %v480, %v477
    %v483 = vrot.slane %v481, 4
    %v485 = vsel %vm193, %v483, 0.0
    %486 = vadd.xlane.f32.xlu0 %v485
    %v487 = vpop.xlane.xlu0 %486
    %v488 = vrot.slane %v487, 4
    %v489 = vadd.f32 %v487, %v488
    %v490 = vrot.slane %v489, 2
    %v491 = vadd.f32 %v489, %v490
    %v492 = vrot.slane %v491, 1
    %v493 = vadd.f32 %v491, %v492
    %s494 = vtos %v493
    %v495 = vstv %s494
    %v496 = vadd.f32 %v205, %v495
    %v497 = vmax.f32 %v324, %v429
    %v498 = vmax.f32 %v324, %v437
    %v499 = vmin.f32 %v325, %v445
    %v500 = vmin.f32 %v325, %v453
    %vm501 = vcmp.gt.f32.partialorder %v499, %v497
    %vm502 = vcmp.gt.f32.partialorder %v500, %v498
    %v503 = vsel %vm502, 1, 0
    %v504 = vrot.slane %v503, 1
    %vm505 = vcmp.ne.s32.totalorder %v504, 0
    %vm506 = vmand %vm501, %vm505
    %v507 = vsub.f32 %v499, %v497
    %v508 = vsub.f32 %v500, %v498
    %v510 = vrot.slane %v508, 1
    %v512 = vmul.f32 %v507, %v510
    %v513 = vsel %vm506, %v512, 0.0
    %v514 = vsub.f32 %v445, %v429
    %v515 = vsub.f32 %v453, %v437
    %v516 = vmul.f32 %v514, %v515
    %v517 = vadd.f32 %v329, %v516
    %v519 = vrot.slane %v513, 6
    %v521 = vsub.f32 %v517, %v519
    %v522 = vadd.f32 %v521, 1e-07
    %v524 = vrot.slane %v522, 2
    %v526 = vrcp.pop %v524
    %v527 = vmul.f32 %v513, %v526
    %v528 = vmin.f32 %v324, %v429
    %v529 = vmin.f32 %v324, %v437
    %v530 = vmax.f32 %v325, %v445
    %v531 = vmax.f32 %v325, %v453
    %v532 = vsub.f32 %v530, %v528
    %v533 = vmul.f32 %v532, %v532
    %v534 = vsub.f32 %v531, %v529
    %v535 = vmul.f32 %v534, %v534
    %v537 = vrot.slane %v535, 1
    %v539 = vadd.f32 %v533, %v537
    %v540 = vadd.f32 %v539, 1e-07
    %v541 = vadd.f32 %v324, %v325
    %v542 = vsub.f32 %v541, %v429
    %v543 = vsub.f32 %v542, %v445
    %v544 = vmul.f32 %v543, %v543
    %v545 = vsub.f32 %v541, %v437
    %v546 = vsub.f32 %v545, %v453
    %v547 = vmul.f32 %v546, %v546
    %v549 = vrot.slane %v547, 1
    %v551 = vadd.f32 %v544, %v549
    %v552 = vmul.f32 %v551, 0.25
    %v553 = vsub.f32 1.0, %v527
    %v554 = vrcp.pop %v540
    %v555 = vmul.f32 %v552, %v554
    %v556 = vadd.f32 %v553, %v555
    %v557 = vsub.f32 %v465, %v316
    %v558 = vmul.f32 %v557, %v557
    %v559 = vmul.f32 %v558, 0.40528473
    %v561 = vrot.slane %v559, 5
    %v563 = vadd.f32 %v553, %v561
    %v564 = vadd.f32 %v563, 1e-07
    %v566 = vrot.slane %v564, 3
    %v568 = vrcp.pop %v566
    %v569 = vmul.f32 %v559, %v568
    %v570 = vmul.f32 %v569, %v559
    %v572 = vrot.slane %v570, 5
    %v574 = vadd.f32 %v556, %v572
    %v575 = vsel %vm193, %v408, 0.0
    %576 = vadd.xlane.f32.xlu0 %v575
    %v577 = vpop.xlane.xlu0 %576
    %v578 = vrot.slane %v577, 4
    %v579 = vadd.f32 %v577, %v578
    %v580 = vrot.slane %v579, 2
    %v581 = vadd.f32 %v579, %v580
    %v582 = vrot.slane %v581, 1
    %v583 = vadd.f32 %v581, %v582
    %s584 = vtos %v583
    %v585 = vstv %s584
    %v586 = vsel %vm406, %v574, 0.0
    %v587 = vsel %vm193, %v586, 0.0
    %588 = vadd.xlane.f32.xlu0 %v587
    %v589 = vpop.xlane.xlu0 %588
    %v590 = vrot.slane %v589, 4
    %v591 = vadd.f32 %v589, %v590
    %v592 = vrot.slane %v591, 2
    %v593 = vadd.f32 %v591, %v592
    %v594 = vrot.slane %v593, 1
    %v595 = vadd.f32 %v593, %v594
    %s596 = vtos %v595
    %v597 = vstv %s596
    %vm598 = vcmp.gt.f32.partialorder %v585, 0.0
    %v599 = vmax.f32 %v585, 1.0
    %v600 = vrcp.pop %v599
    %v601 = vmul.f32 %v597, %v600
    %v602 = vsel %vm598, %v601, 0.0
    %v603 = vadd.f32 %v312, %v602
    %v604 = vsel %vm598, 1.0, 0.0
    %v605 = vadd.f32 %v314, %v604
    %v606 = vrcp.pop 128.0
    %v607 = vmul.f32 %v496, %v606
    %vm608 = vcmp.gt.f32.partialorder %v605, 0.0
    %v609 = vmax.f32 %v605, 1.0
    %v610 = vrcp.pop %v609
    %v611 = vmul.f32 %v603, %v610
    %v612 = vsel %vm608, %v611, 0.0
    %v613 = vmul.f32 %v607, 3.0
    %v614 = vmul.f32 %v612, 7.5
    %v615 = vadd.f32 %v613, %v614
    %vm616 = vcmask 0
    %617 = vst.msk [vmem:[#allocation4] sm:$0x1] %vm616, %v615
    // Predicated region
    $region14: #{tpu_custom_call.1} parent=1 // pred_check
      _
    $region15: #{tpu_custom_call.1} parent=1 // pred_check_branch
      %619 = sbr.rel (0) target = $region17
    $region16: #{tpu_custom_call.1} parent=1 // pred_region
      %s621 = ssub.s32 16, 16
      %622 = vsyncadd [#allocation5], %s621
      %s624 = sshll.u32 [#allocation4], 4
      %s625 = int_to_ptr.vmem [resolvable:$true] %s624
      %627 = dma.vmem_to_hbm [thread:$0]  %s625, 16, %s4, [#allocation5]
    $region17: #{tpu_custom_call.1} parent=1 // pred_fallthru
      _
    // Predicated region
    $region18: #{tpu_custom_call.1} parent=1 // pred_check
      _
    $region19: #{tpu_custom_call.1} parent=1 // pred_check_branch
      %629 = sbr.rel (0) target = $region21
    $region20: #{tpu_custom_call.1} parent=1 // pred_region
      %630 = dma.done [#allocation5], 16
    $region21: #{tpu_custom_call.1} parent=1 // pred_fallthru
      _
    %631 = vsyncpa [#allocation5], 1

</llo_original>
